<compile_context>
chip_gen: v6e
topology: v6e:2x2x1
jax: 0.10.0
libtpu: 0.0.40
codegen_flags: <defaults>
</compile_context>

<pallas_src>
import jax
import jax.numpy as jnp
from jax.experimental import pallas as pl
from jax.experimental.pallas import tpu as pltpu


# ----------------------------------------------------------------------------
# Kernel: one batch block (BB batch elements, flattened to BN = BB*N rows).
# ----------------------------------------------------------------------------
def _context_attention_kernel(
    x_ref, adj_ref, mask_ref,
    w1_ref, b1_ref, w2_ref, b2_ref,
    wg1_ref, bg1_ref, wg2_ref, bg2_ref,
    wa1_ref, ba1_ref, wa2t_ref, ba2_ref,
    out_ref,
):
    f32 = jnp.float32
    bf16 = jnp.bfloat16
    E = w2_ref.shape[1]                     # embedding width (256)

    x = x_ref[...]                          # [BN, F]  bf16
    adj_bd = adj_ref[...]                   # [BN, BN] bf16 block-diagonal

    # ---- embedding MLP on the [BN, F] slab (bf16 MXU, f32 accumulation) ----
    h = jnp.maximum(
        jnp.dot(x, w1_ref[...], preferred_element_type=f32) + b1_ref[...], 0.0)
    e = jnp.maximum(
        jnp.dot(h.astype(bf16), w2_ref[...], preferred_element_type=f32)
        + b2_ref[...], 0.0)                                             # [BN, E] f32

    # ---- GCN: cx = relu(gcn1(adj @ e)); cx = relu(gcn2(adj @ cx)) ----
    ax = jnp.dot(adj_bd, e.astype(bf16), preferred_element_type=f32)
    cx = jnp.maximum(
        jnp.dot(ax.astype(bf16), wg1_ref[...], preferred_element_type=f32)
        + bg1_ref[...], 0.0)
    acx = jnp.dot(adj_bd, cx.astype(bf16), preferred_element_type=f32)
    cx = jnp.maximum(
        jnp.dot(acx.astype(bf16), wg2_ref[...], preferred_element_type=f32)
        + bg2_ref[...], 0.0)                                            # [BN, E] f32

    # ---- attention MLP on cat([e, cx], -1): split wa1 instead of concat ----
    wa1 = wa1_ref[...]
    a1 = jnp.maximum(
        jnp.dot(e.astype(bf16), wa1[0:E, :], preferred_element_type=f32)
        + jnp.dot(cx.astype(bf16), wa1[E:2 * E, :], preferred_element_type=f32)
        + ba1_ref[...], 0.0)                                            # [BN, A] f32

    # logits as a lane-dense [1, BN] row: [1, A] @ [A, BN] on the MXU
    logits_row = jnp.dot(wa2t_ref[...], a1.astype(bf16).T,
                         preferred_element_type=f32) + ba2_ref[...]     # [1, BN]

    # ---- per-batch softmax in [BB, BN] layout (lane-axis reductions) ----
    # mask_ref[b, r] is 0.0 for batch b's own nodes, -1e30 elsewhere.
    masked = logits_row + mask_ref[...]                # [BB, BN]
    m = jnp.max(masked, axis=-1, keepdims=True)        # [BB, 1]
    p = jnp.exp(masked - m)                            # off-block entries -> 0
    denom = jnp.sum(p, axis=-1, keepdims=True)         # [BB, 1]
    att = p / denom                                    # exact f32 normalization

    # ---- attention-weighted sums as transpose-free MXU matmuls ----
    att_bf = att.astype(bf16)
    out_e = jnp.dot(att_bf, e.astype(bf16), preferred_element_type=f32)   # [BB, E]
    out_c = jnp.dot(att_bf, cx.astype(bf16), preferred_element_type=f32)  # [BB, E]
    out_ref[0, :, :] = jnp.concatenate([out_e, out_c], axis=-1)


# ----------------------------------------------------------------------------
# Wrapper
# ----------------------------------------------------------------------------
def context_attention(x, adj, params, block_b=16):
    """x: [B, N, F] f32, adj: [B, N, N] f32 -> ([B, 512] f32, None)."""
    B, N, F = x.shape
    (w1, b1, w2, b2, wg1, bg1, wg2, bg2, wa1, ba1, wa2, ba2) = params
    E = w2.shape[1]
    A = wa1.shape[1]
    bf16 = jnp.bfloat16

    # --- pad the narrow first hidden layer up to a multiple of 128 lanes ---
    # Bit-exact: padded w1 columns / b1 entries are 0, so the extra h columns
    # are relu(0) = 0 and the padded w2 rows contribute nothing.
    hid = w1.shape[1]
    hid_p = -(-hid // 128) * 128
    if hid_p != hid:
        w1 = jnp.pad(w1, ((0, 0), (0, hid_p - hid)))
        b1 = jnp.pad(b1, ((0, hid_p - hid),))
        w2 = jnp.pad(w2, ((0, hid_p - hid), (0, 0)))

    # --- batch blocking: BB batch elements (BN = BB*N rows) per grid step ---
    BB = max(1, min(block_b, B))
    if (BB * N) % 16 != 0:
        BB = B           # single full-batch block always satisfies tiling rules
    G = -(-B // BB)
    Bp = G * BB
    if Bp != B:
        pad = Bp - B     # padded batches give finite (bias-only) outputs, sliced off
        x = jnp.pad(x, ((0, pad), (0, 0), (0, 0)))
        adj = jnp.pad(adj, ((0, pad), (0, 0), (0, 0)))
    BN = BB * N

    # flat [B*N, F] slab, bf16 MXU operand
    x2 = x.reshape(Bp * N, F).astype(bf16)

    # --- hoisted, grid-invariant structure (built once outside the kernel) ---
    # block-diagonal adjacency: adj_bd[g*BN + b*N + i, c*N + j] = adj[g*BB+b,i,j]*(b==c)
    adj_blocks = adj.reshape(G, BB, N, N)
    eye_bb = jnp.eye(BB, dtype=adj.dtype)
    adj_bd = (adj_blocks[:, :, :, None, :]
              * eye_bb[None, :, None, :, None]).reshape(G * BN, BN).astype(bf16)

    # softmax mask bias: 0 on own-batch columns, -1e30 elsewhere   [BB, BN]
    col_batch = jnp.arange(BN, dtype=jnp.int32) // N
    mask_bias = jnp.where(
        col_batch[None, :] == jnp.arange(BB, dtype=jnp.int32)[:, None],
        0.0, -1e30).astype(jnp.float32)

    # weights -> bf16 MXU operands; biases stay f32 (added after f32 accum)
    w1b, w2b = w1.astype(bf16), w2.astype(bf16)
    wg1b, wg2b = wg1.astype(bf16), wg2.astype(bf16)
    wa1b = wa1.astype(bf16)
    wa2t = wa2.reshape(1, A).astype(bf16)
    b1r, b2r = b1.reshape(1, -1), b2.reshape(1, -1)
    bg1r, bg2r = bg1.reshape(1, -1), bg2.reshape(1, -1)
    ba1r, ba2r = ba1.reshape(1, -1), ba2.reshape(1, 1)

    consts = (mask_bias, w1b, b1r, w2b, b2r, wg1b, bg1r, wg2b, bg2r,
              wa1b, ba1r, wa2t, ba2r)

    def const_spec(a):
        nd = a.ndim
        # constant index_map -> the pipeline DMAs these blocks only once
        return pl.BlockSpec(a.shape, lambda g, _nd=nd: (0,) * _nd)

    out = pl.pallas_call(
        _context_attention_kernel,
        out_shape=jax.ShapeDtypeStruct((G, BB, 2 * E), jnp.float32),
        grid_spec=pltpu.PrefetchScalarGridSpec(
            num_scalar_prefetch=0,
            grid=(G,),
            in_specs=[
                pl.BlockSpec((BN, F), lambda g: (g, 0)),    # x slab
                pl.BlockSpec((BN, BN), lambda g: (g, 0)),   # lane-dense block-diag adj
            ] + [const_spec(a) for a in consts],
            out_specs=pl.BlockSpec((1, BB, 2 * E), lambda g: (g, 0, 0)),
        ),
        compiler_params=pltpu.CompilerParams(
            dimension_semantics=("parallel",)),
    )(x2, adj_bd, *consts)

    return out.reshape(Bp, 2 * E)[:B], None


# ----------------------------------------------------------------------------
# Deterministic parameter construction (synthetic init, not a checkpoint)
# ----------------------------------------------------------------------------
def make_params(key, in_size):
    hid = in_size // 2
    shapes = [
        (in_size, hid), (hid,),     # embedding layer 1
        (hid, 256), (256,),         # embedding layer 2
        (256, 256), (256,),         # gcn1
        (256, 256), (256,),         # gcn2
        (512, 128), (128,),         # att layer 1
        (128, 1), (1,),             # att layer 2
    ]
    keys = jax.random.split(key, len(shapes))
    params = []
    for k, s in zip(keys, shapes):
        fan_in = s[0]
        params.append(
            jax.random.normal(k, s, dtype=jnp.float32) * (1.0 / jnp.sqrt(fan_in)))
    return tuple(params)


# ----------------------------------------------------------------------------
# References
# ----------------------------------------------------------------------------
def reference_f32(x, adj, params):
    """Natural float32 reference (matches the PyTorch module)."""
    (w1, b1, w2, b2, wg1, bg1, wg2, bg2, wa1, ba1, wa2, ba2) = params
    h = jax.nn.relu(x @ w1 + b1)
    e = jax.nn.relu(h @ w2 + b2)
    cx = jax.nn.relu(jnp.matmul(adj, e) @ wg1 + bg1)
    cx = jax.nn.relu(jnp.matmul(adj, cx) @ wg2 + bg2)
    cat = jnp.concatenate([e, cx], axis=2)
    a1 = jax.nn.relu(cat @ wa1 + ba1)
    logits = a1 @ wa2 + ba2
    att = jax.nn.softmax(logits, axis=1)
    return jnp.sum(cat * att, axis=1)


def reference_matched(x, adj, params):
    """Same math, mirroring the kernel's bf16-operand / f32-accumulation MXU use."""
    (w1, b1, w2, b2, wg1, bg1, wg2, bg2, wa1, ba1, wa2, ba2) = params
    f32, bf16 = jnp.float32, jnp.bfloat16
    E = w2.shape[1]

    def mm(a, b):      # [..., K] @ [K, M], bf16 operands, f32 accumulation
        return jnp.einsum('...ij,jk->...ik', a.astype(bf16), b.astype(bf16),
                          preferred_element_type=f32)

    def bmm(a, b):     # batched adjacency product
        return jnp.einsum('bij,bjk->bik', a.astype(bf16), b.astype(bf16),
                          preferred_element_type=f32)

    h = jax.nn.relu(mm(x, w1) + b1)
    e = jax.nn.relu(mm(h, w2) + b2)
    cx = jax.nn.relu(mm(bmm(adj, e), wg1) + bg1)
    cx = jax.nn.relu(mm(bmm(adj, cx), wg2) + bg2)
    a1 = jax.nn.relu(mm(e, wa1[:E]) + mm(cx, wa1[E:]) + ba1)
    logits = jnp.einsum('bnk,kj->bnj', a1.astype(bf16), wa2.astype(bf16),
                        preferred_element_type=f32) + ba2
    att = jax.nn.softmax(logits, axis=1)
    cat = jnp.concatenate([e, cx], axis=2)
    att_b = att.astype(bf16).astype(f32)
    cat_b = cat.astype(bf16).astype(f32)
    return jnp.sum(cat_b * att_b, axis=1)


if __name__ == "__main__":
    # batch=32, nodes(seq)=8, in_size=32: with block_b=16 that is BN=128 rows
    # per grid step (full MXU row fill) and a 2-step parallel grid (both TCs
    # on v7x stay busy).
    B, N, F = 32, 8, 32

    key = jax.random.PRNGKey(0)
    kx, ka, kp = jax.random.split(key, 3)
    x = jax.random.normal(kx, (B, N, F), dtype=jnp.float32)
    adj = jax.random.uniform(ka, (B, N, N), dtype=jnp.float32)
    params = make_params(kp, F)

    out, none_out = context_attention(x, adj, params, block_b=16)
    out = jax.block_until_ready(out)

    assert out.shape == (B, 512)
    assert none_out is None

    ref_m = reference_matched(x, adj, params)   # same bf16 operand rounding
    ref_f = reference_f32(x, adj, params)       # plain f32 sanity reference

    err_m = float(jnp.max(jnp.abs(out - ref_m)))
    assert jnp.allclose(out, ref_m, atol=5e-3, rtol=5e-3), (
        f"mismatch vs matched-precision reference (max abs err {err_m})")
    assert jnp.allclose(out, ref_f, atol=1e-1, rtol=1e-1), (
        "mismatch vs float32 reference")

    print("KERNEL_OK")
</pallas_src>

<mosaic_0001>
module attributes {stable_mosaic.version = 11 : i64} {
  func.func @_context_attention_kernel(%arg0: i32, %arg1: memref<128x32xbf16, #tpu.memory_space<vmem>>, %arg2: memref<128x128xbf16, #tpu.memory_space<vmem>>, %arg3: memref<16x128xf32, #tpu.memory_space<vmem>>, %arg4: memref<32x128xbf16, #tpu.memory_space<vmem>>, %arg5: memref<1x128xf32, #tpu.memory_space<vmem>>, %arg6: memref<128x256xbf16, #tpu.memory_space<vmem>>, %arg7: memref<1x256xf32, #tpu.memory_space<vmem>>, %arg8: memref<256x256xbf16, #tpu.memory_space<vmem>>, %arg9: memref<1x256xf32, #tpu.memory_space<vmem>>, %arg10: memref<256x256xbf16, #tpu.memory_space<vmem>>, %arg11: memref<1x256xf32, #tpu.memory_space<vmem>>, %arg12: memref<512x128xbf16, #tpu.memory_space<vmem>>, %arg13: memref<1x128xf32, #tpu.memory_space<vmem>>, %arg14: memref<1x128xbf16, #tpu.memory_space<vmem>>, %arg15: memref<1x1xf32, #tpu.memory_space<vmem>>, %arg16: memref<1x16x512xf32, #tpu.memory_space<vmem>>) attributes {dimension_semantics = [#tpu.dimension_semantics<parallel>], iteration_bounds = array<i64: 2>, scalar_prefetch = 0 : i64, scratch_operands = 0 : i64, tpu.core_type = #tpu.core_type<tc>, window_params = [{transform_indices = @transform_0, window_bounds = array<i64: 128, 32>}, {transform_indices = @transform_1, window_bounds = array<i64: 128, 128>}, {pipeline_mode = #tpu.pipeline_mode<synchronous>, transform_indices = @transform_2, window_bounds = array<i64: 16, 128>}, {pipeline_mode = #tpu.pipeline_mode<synchronous>, transform_indices = @transform_3, window_bounds = array<i64: 32, 128>}, {pipeline_mode = #tpu.pipeline_mode<synchronous>, transform_indices = @transform_4, window_bounds = array<i64: 1, 128>}, {pipeline_mode = #tpu.pipeline_mode<synchronous>, transform_indices = @transform_5, window_bounds = array<i64: 128, 256>}, {pipeline_mode = #tpu.pipeline_mode<synchronous>, transform_indices = @transform_6, window_bounds = array<i64: 1, 256>}, {pipeline_mode = #tpu.pipeline_mode<synchronous>, transform_indices = @transform_7, window_bounds = array<i64: 256, 256>}, {pipeline_mode = #tpu.pipeline_mode<synchronous>, transform_indices = @transform_8, window_bounds = array<i64: 1, 256>}, {pipeline_mode = #tpu.pipeline_mode<synchronous>, transform_indices = @transform_9, window_bounds = array<i64: 256, 256>}, {pipeline_mode = #tpu.pipeline_mode<synchronous>, transform_indices = @transform_10, window_bounds = array<i64: 1, 256>}, {pipeline_mode = #tpu.pipeline_mode<synchronous>, transform_indices = @transform_11, window_bounds = array<i64: 512, 128>}, {pipeline_mode = #tpu.pipeline_mode<synchronous>, transform_indices = @transform_12, window_bounds = array<i64: 1, 128>}, {pipeline_mode = #tpu.pipeline_mode<synchronous>, transform_indices = @transform_13, window_bounds = array<i64: 1, 128>}, {pipeline_mode = #tpu.pipeline_mode<synchronous>, transform_indices = @transform_14, window_bounds = array<i64: 1, 1>}, {transform_indices = @transform_15, window_bounds = array<i64: 1, 16, 512>}]} {
    %c0 = arith.constant 0 : index
    %c0_0 = arith.constant 0 : index
    %0 = vector.load %arg1[%c0, %c0_0] : memref<128x32xbf16, #tpu.memory_space<vmem>>, vector<128x32xbf16>
    %c0_1 = arith.constant 0 : index
    %c0_2 = arith.constant 0 : index
    %1 = vector.load %arg2[%c0_1, %c0_2] : memref<128x128xbf16, #tpu.memory_space<vmem>>, vector<128x128xbf16>
    %c0_3 = arith.constant 0 : index
    %c0_4 = arith.constant 0 : index
    %2 = vector.load %arg4[%c0_3, %c0_4] : memref<32x128xbf16, #tpu.memory_space<vmem>>, vector<32x128xbf16>
    %cst = arith.constant dense<0.000000e+00> : vector<128x128xf32>
    %3 = tpu.matmul %0, %2, %cst {dimension_numbers = #tpu.dot_dimension_numbers<[1], [0], [0], [1], [0, 0, 1, 1], [], []>} : vector<128x32xbf16>, vector<32x128xbf16>, vector<128x128xf32> -> vector<128x128xf32>
    %c0_5 = arith.constant 0 : index
    %c0_6 = arith.constant 0 : index
    %4 = vector.load %arg5[%c0_5, %c0_6] : memref<1x128xf32, #tpu.memory_space<vmem>>, vector<1x128xf32>
    %5 = vector.broadcast %4 : vector<1x128xf32> to vector<128x128xf32>
    %6 = arith.addf %3, %5 : vector<128x128xf32>
    %cst_7 = arith.constant 0.000000e+00 : f32
    %7 = vector.broadcast %cst_7 : f32 to vector<128x128xf32>
    %8 = arith.maximumf %6, %7 : vector<128x128xf32>
    %9 = arith.truncf %8 : vector<128x128xf32> to vector<128x128xbf16>
    %c0_8 = arith.constant 0 : index
    %c0_9 = arith.constant 0 : index
    %10 = vector.load %arg6[%c0_8, %c0_9] : memref<128x256xbf16, #tpu.memory_space<vmem>>, vector<128x256xbf16>
    %cst_10 = arith.constant dense<0.000000e+00> : vector<128x256xf32>
    %11 = tpu.matmul %9, %10, %cst_10 {dimension_numbers = #tpu.dot_dimension_numbers<[1], [0], [0], [1], [0, 0, 1, 1], [], []>} : vector<128x128xbf16>, vector<128x256xbf16>, vector<128x256xf32> -> vector<128x256xf32>
    %c0_11 = arith.constant 0 : index
    %c0_12 = arith.constant 0 : index
    %12 = vector.load %arg7[%c0_11, %c0_12] : memref<1x256xf32, #tpu.memory_space<vmem>>, vector<1x256xf32>
    %13 = vector.broadcast %12 : vector<1x256xf32> to vector<128x256xf32>
    %14 = arith.addf %11, %13 : vector<128x256xf32>
    %cst_13 = arith.constant 0.000000e+00 : f32
    %15 = vector.broadcast %cst_13 : f32 to vector<128x256xf32>
    %16 = arith.maximumf %14, %15 : vector<128x256xf32>
    %17 = arith.truncf %16 : vector<128x256xf32> to vector<128x256xbf16>
    %cst_14 = arith.constant dense<0.000000e+00> : vector<128x256xf32>
    %18 = tpu.matmul %1, %17, %cst_14 {dimension_numbers = #tpu.dot_dimension_numbers<[1], [0], [0], [1], [0, 0, 1, 1], [], []>} : vector<128x128xbf16>, vector<128x256xbf16>, vector<128x256xf32> -> vector<128x256xf32>
    %19 = arith.truncf %18 : vector<128x256xf32> to vector<128x256xbf16>
    %c0_15 = arith.constant 0 : index
    %c0_16 = arith.constant 0 : index
    %20 = vector.load %arg8[%c0_15, %c0_16] : memref<256x256xbf16, #tpu.memory_space<vmem>>, vector<256x256xbf16>
    %cst_17 = arith.constant dense<0.000000e+00> : vector<128x256xf32>
    %21 = tpu.matmul %19, %20, %cst_17 {dimension_numbers = #tpu.dot_dimension_numbers<[1], [0], [0], [1], [0, 0, 1, 1], [], []>} : vector<128x256xbf16>, vector<256x256xbf16>, vector<128x256xf32> -> vector<128x256xf32>
    %c0_18 = arith.constant 0 : index
    %c0_19 = arith.constant 0 : index
    %22 = vector.load %arg9[%c0_18, %c0_19] : memref<1x256xf32, #tpu.memory_space<vmem>>, vector<1x256xf32>
    %23 = vector.broadcast %22 : vector<1x256xf32> to vector<128x256xf32>
    %24 = arith.addf %21, %23 : vector<128x256xf32>
    %cst_20 = arith.constant 0.000000e+00 : f32
    %25 = vector.broadcast %cst_20 : f32 to vector<128x256xf32>
    %26 = arith.maximumf %24, %25 : vector<128x256xf32>
    %27 = arith.truncf %26 : vector<128x256xf32> to vector<128x256xbf16>
    %cst_21 = arith.constant dense<0.000000e+00> : vector<128x256xf32>
    %28 = tpu.matmul %1, %27, %cst_21 {dimension_numbers = #tpu.dot_dimension_numbers<[1], [0], [0], [1], [0, 0, 1, 1], [], []>} : vector<128x128xbf16>, vector<128x256xbf16>, vector<128x256xf32> -> vector<128x256xf32>
    %29 = arith.truncf %28 : vector<128x256xf32> to vector<128x256xbf16>
    %c0_22 = arith.constant 0 : index
    %c0_23 = arith.constant 0 : index
    %30 = vector.load %arg10[%c0_22, %c0_23] : memref<256x256xbf16, #tpu.memory_space<vmem>>, vector<256x256xbf16>
    %cst_24 = arith.constant dense<0.000000e+00> : vector<128x256xf32>
    %31 = tpu.matmul %29, %30, %cst_24 {dimension_numbers = #tpu.dot_dimension_numbers<[1], [0], [0], [1], [0, 0, 1, 1], [], []>} : vector<128x256xbf16>, vector<256x256xbf16>, vector<128x256xf32> -> vector<128x256xf32>
    %c0_25 = arith.constant 0 : index
    %c0_26 = arith.constant 0 : index
    %32 = vector.load %arg11[%c0_25, %c0_26] : memref<1x256xf32, #tpu.memory_space<vmem>>, vector<1x256xf32>
    %33 = vector.broadcast %32 : vector<1x256xf32> to vector<128x256xf32>
    %34 = arith.addf %31, %33 : vector<128x256xf32>
    %cst_27 = arith.constant 0.000000e+00 : f32
    %35 = vector.broadcast %cst_27 : f32 to vector<128x256xf32>
    %36 = arith.maximumf %34, %35 : vector<128x256xf32>
    %c0_28 = arith.constant 0 : index
    %c0_29 = arith.constant 0 : index
    %37 = vector.load %arg12[%c0_28, %c0_29] : memref<512x128xbf16, #tpu.memory_space<vmem>>, vector<512x128xbf16>
    %38 = arith.truncf %16 : vector<128x256xf32> to vector<128x256xbf16>
    %39 = vector.extract_strided_slice %37 {offsets = [0, 0], sizes = [256, 128], strides = [1, 1]} : vector<512x128xbf16> to vector<256x128xbf16>
    %cst_30 = arith.constant dense<0.000000e+00> : vector<128x128xf32>
    %40 = tpu.matmul %38, %39, %cst_30 {dimension_numbers = #tpu.dot_dimension_numbers<[1], [0], [0], [1], [0, 0, 1, 1], [], []>} : vector<128x256xbf16>, vector<256x128xbf16>, vector<128x128xf32> -> vector<128x128xf32>
    %41 = arith.truncf %36 : vector<128x256xf32> to vector<128x256xbf16>
    %42 = vector.extract_strided_slice %37 {offsets = [256, 0], sizes = [256, 128], strides = [1, 1]} : vector<512x128xbf16> to vector<256x128xbf16>
    %cst_31 = arith.constant dense<0.000000e+00> : vector<128x128xf32>
    %43 = tpu.matmul %41, %42, %cst_31 {dimension_numbers = #tpu.dot_dimension_numbers<[1], [0], [0], [1], [0, 0, 1, 1], [], []>} : vector<128x256xbf16>, vector<256x128xbf16>, vector<128x128xf32> -> vector<128x128xf32>
    %44 = arith.addf %40, %43 : vector<128x128xf32>
    %c0_32 = arith.constant 0 : index
    %c0_33 = arith.constant 0 : index
    %45 = vector.load %arg13[%c0_32, %c0_33] : memref<1x128xf32, #tpu.memory_space<vmem>>, vector<1x128xf32>
    %46 = vector.broadcast %45 : vector<1x128xf32> to vector<128x128xf32>
    %47 = arith.addf %44, %46 : vector<128x128xf32>
    %cst_34 = arith.constant 0.000000e+00 : f32
    %48 = vector.broadcast %cst_34 : f32 to vector<128x128xf32>
    %49 = arith.maximumf %47, %48 : vector<128x128xf32>
    %c0_35 = arith.constant 0 : index
    %c0_36 = arith.constant 0 : index
    %50 = vector.load %arg14[%c0_35, %c0_36] : memref<1x128xbf16, #tpu.memory_space<vmem>>, vector<1x128xbf16>
    %51 = arith.truncf %49 : vector<128x128xf32> to vector<128x128xbf16>
    %52 = tpu.transpose %51, [1, 0] : vector<128x128xbf16> -> vector<128x128xbf16>
    %cst_37 = arith.constant dense<0.000000e+00> : vector<1x128xf32>
    %53 = tpu.matmul %50, %52, %cst_37 {dimension_numbers = #tpu.dot_dimension_numbers<[1], [0], [0], [1], [0, 0, 1, 1], [], []>} : vector<1x128xbf16>, vector<128x128xbf16>, vector<1x128xf32> -> vector<1x128xf32>
    %c0_38 = arith.constant 0 : index
    %c0_39 = arith.constant 0 : index
    %54 = vector.load %arg15[%c0_38, %c0_39] : memref<1x1xf32, #tpu.memory_space<vmem>>, vector<1x1xf32>
    %55 = vector.broadcast %54 : vector<1x1xf32> to vector<1x128xf32>
    %56 = arith.addf %53, %55 : vector<1x128xf32>
    %c0_40 = arith.constant 0 : index
    %c0_41 = arith.constant 0 : index
    %57 = vector.load %arg3[%c0_40, %c0_41] : memref<16x128xf32, #tpu.memory_space<vmem>>, vector<16x128xf32>
    %58 = vector.broadcast %56 : vector<1x128xf32> to vector<16x128xf32>
    %59 = arith.addf %58, %57 : vector<16x128xf32>
    %cst_42 = arith.constant dense<0xFF800000> : vector<16xf32>
    %60 = vector.multi_reduction <maximumf>, %59, %cst_42 [1] : vector<16x128xf32> to vector<16xf32>
    %61 = vector.shape_cast %60 : vector<16xf32> to vector<16x1xf32>
    %62 = vector.broadcast %61 : vector<16x1xf32> to vector<16x128xf32>
    %63 = arith.subf %59, %62 : vector<16x128xf32>
    %64 = math.exp %63 : vector<16x128xf32>
    %cst_43 = arith.constant dense<0.000000e+00> : vector<16xf32>
    %65 = vector.multi_reduction <add>, %64, %cst_43 [1] : vector<16x128xf32> to vector<16xf32>
    %66 = vector.shape_cast %65 : vector<16xf32> to vector<16x1xf32>
    %67 = vector.broadcast %66 : vector<16x1xf32> to vector<16x128xf32>
    %68 = arith.divf %64, %67 : vector<16x128xf32>
    %69 = arith.truncf %68 : vector<16x128xf32> to vector<16x128xbf16>
    %70 = arith.truncf %16 : vector<128x256xf32> to vector<128x256xbf16>
    %cst_44 = arith.constant dense<0.000000e+00> : vector<16x256xf32>
    %71 = tpu.matmul %69, %70, %cst_44 {dimension_numbers = #tpu.dot_dimension_numbers<[1], [0], [0], [1], [0, 0, 1, 1], [], []>} : vector<16x128xbf16>, vector<128x256xbf16>, vector<16x256xf32> -> vector<16x256xf32>
    %72 = arith.truncf %36 : vector<128x256xf32> to vector<128x256xbf16>
    %cst_45 = arith.constant dense<0.000000e+00> : vector<16x256xf32>
    %73 = tpu.matmul %69, %72, %cst_45 {dimension_numbers = #tpu.dot_dimension_numbers<[1], [0], [0], [1], [0, 0, 1, 1], [], []>} : vector<16x128xbf16>, vector<128x256xbf16>, vector<16x256xf32> -> vector<16x256xf32>
    %74 = tpu.concatenate %71, %73 in 1 : vector<16x256xf32>, vector<16x256xf32> -> vector<16x512xf32>
    %c0_46 = arith.constant 0 : index
    %c0_47 = arith.constant 0 : index
    %c0_48 = arith.constant 0 : index
    %75 = vector.load %arg16[%c0_46, %c0_47, %c0_48] : memref<1x16x512xf32, #tpu.memory_space<vmem>>, vector<1x16x512xf32>
    %76 = vector.shape_cast %75 : vector<1x16x512xf32> to vector<16x512xf32>
    %77 = vector.shape_cast %74 : vector<16x512xf32> to vector<1x16x512xf32>
    tpu.vector_store %arg16[%c0_46, %c0_47, %c0_48], %77 {strides = array<i32>} : memref<1x16x512xf32, #tpu.memory_space<vmem>>, vector<1x16x512xf32>,
    return
  }
  func.func @transform_0(%arg0: i32) -> (i32, i32) {
    %c0_i32 = arith.constant 0 : i32
    %c0_i32_0 = arith.constant 0 : i32
    return %arg0, %c0_i32 : i32, i32
  }
  func.func @transform_1(%arg0: i32) -> (i32, i32) {
    %c0_i32 = arith.constant 0 : i32
    %c0_i32_0 = arith.constant 0 : i32
    return %arg0, %c0_i32 : i32, i32
  }
  func.func @transform_2(%arg0: i32) -> (i32, i32) {
    %c0_i32 = arith.constant 0 : i32
    %c0_i32_0 = arith.constant 0 : i32
    %c0_i32_1 = arith.constant 0 : i32
    return %c0_i32, %c0_i32_0 : i32, i32
  }
  func.func @transform_3(%arg0: i32) -> (i32, i32) {
    %c0_i32 = arith.constant 0 : i32
    %c0_i32_0 = arith.constant 0 : i32
    %c0_i32_1 = arith.constant 0 : i32
    return %c0_i32, %c0_i32_0 : i32, i32
  }
  func.func @transform_4(%arg0: i32) -> (i32, i32) {
    %c0_i32 = arith.constant 0 : i32
    %c0_i32_0 = arith.constant 0 : i32
    %c0_i32_1 = arith.constant 0 : i32
    return %c0_i32, %c0_i32_0 : i32, i32
  }
  func.func @transform_5(%arg0: i32) -> (i32, i32) {
    %c0_i32 = arith.constant 0 : i32
    %c0_i32_0 = arith.constant 0 : i32
    %c0_i32_1 = arith.constant 0 : i32
    return %c0_i32, %c0_i32_0 : i32, i32
  }
  func.func @transform_6(%arg0: i32) -> (i32, i32) {
    %c0_i32 = arith.constant 0 : i32
    %c0_i32_0 = arith.constant 0 : i32
    %c0_i32_1 = arith.constant 0 : i32
    return %c0_i32, %c0_i32_0 : i32, i32
  }
  func.func @transform_7(%arg0: i32) -> (i32, i32) {
    %c0_i32 = arith.constant 0 : i32
    %c0_i32_0 = arith.constant 0 : i32
    %c0_i32_1 = arith.constant 0 : i32
    return %c0_i32, %c0_i32_0 : i32, i32
  }
  func.func @transform_8(%arg0: i32) -> (i32, i32) {
    %c0_i32 = arith.constant 0 : i32
    %c0_i32_0 = arith.constant 0 : i32
    %c0_i32_1 = arith.constant 0 : i32
    return %c0_i32, %c0_i32_0 : i32, i32
  }
  func.func @transform_9(%arg0: i32) -> (i32, i32) {
    %c0_i32 = arith.constant 0 : i32
    %c0_i32_0 = arith.constant 0 : i32
    %c0_i32_1 = arith.constant 0 : i32
    return %c0_i32, %c0_i32_0 : i32, i32
  }
  func.func @transform_10(%arg0: i32) -> (i32, i32) {
    %c0_i32 = arith.constant 0 : i32
    %c0_i32_0 = arith.constant 0 : i32
    %c0_i32_1 = arith.constant 0 : i32
    return %c0_i32, %c0_i32_0 : i32, i32
  }
  func.func @transform_11(%arg0: i32) -> (i32, i32) {
    %c0_i32 = arith.constant 0 : i32
    %c0_i32_0 = arith.constant 0 : i32
    %c0_i32_1 = arith.constant 0 : i32
    return %c0_i32, %c0_i32_0 : i32, i32
  }
  func.func @transform_12(%arg0: i32) -> (i32, i32) {
    %c0_i32 = arith.constant 0 : i32
    %c0_i32_0 = arith.constant 0 : i32
    %c0_i32_1 = arith.constant 0 : i32
    return %c0_i32, %c0_i32_0 : i32, i32
  }
  func.func @transform_13(%arg0: i32) -> (i32, i32) {
    %c0_i32 = arith.constant 0 : i32
    %c0_i32_0 = arith.constant 0 : i32
    %c0_i32_1 = arith.constant 0 : i32
    return %c0_i32, %c0_i32_0 : i32, i32
  }
  func.func @transform_14(%arg0: i32) -> (i32, i32) {
    %c0_i32 = arith.constant 0 : i32
    %c0_i32_0 = arith.constant 0 : i32
    %c0_i32_1 = arith.constant 0 : i32
    return %c0_i32, %c0_i32_0 : i32, i32
  }
  func.func @transform_15(%arg0: i32) -> (i32, i32, i32) {
    %c0_i32 = arith.constant 0 : i32
    %c0_i32_0 = arith.constant 0 : i32
    %c0_i32_1 = arith.constant 0 : i32
    return %arg0, %c0_i32, %c0_i32_0 : i32, i32, i32
  }
}

</mosaic_0001>

<llo_original>
// kernel: tpu_custom_call.1
$region0: #{tpu_custom_call.1}
  #allocation0 [shape = 'u32[]', space=smem, size = 0x4, offset = 0x4, fixed_abs, tag = 'smem constant byte address 0x4 - core index']
  #allocation1 [shape = 'u32[144,128]{1,0:T(1,128)}', space=vmem, size = 0x12000, scoped, tag = 'internal scratch']
  #allocation2 [shape = 'f32[1,1]{1,0:T(1,128)S(1)}', space=vmem, size = 0x200, scoped, tag = 'scoped memory for tpu_custom_call.1']
  %s0 = inlined_call_operand.vmem [shape: bf16[256,32], index: 0, kind: input, shape index: {}]
  %s1 = inlined_call_operand.vmem [shape: bf16[256,128], index: 1, kind: input, shape index: {}]
  %s2 = inlined_call_operand.vmem [shape: f32[16,128], index: 2, kind: input, shape index: {}]
  %s3 = inlined_call_operand.vmem [shape: bf16[32,128], index: 3, kind: input, shape index: {}]
  %s4 = inlined_call_operand.vmem [shape: f32[1,128], index: 4, kind: input, shape index: {}]
  %s5 = inlined_call_operand.hbm [shape: bf16[128,256], index: 5, kind: input, shape index: {}]
  %s6 = inlined_call_operand.vmem [shape: f32[1,256], index: 6, kind: input, shape index: {}]
  %s7 = inlined_call_operand.hbm [shape: bf16[256,256], index: 7, kind: input, shape index: {}]
  %s8 = inlined_call_operand.vmem [shape: f32[1,256], index: 8, kind: input, shape index: {}]
  %s9 = inlined_call_operand.hbm [shape: bf16[256,256], index: 9, kind: input, shape index: {}]
  %s10 = inlined_call_operand.vmem [shape: f32[1,256], index: 10, kind: input, shape index: {}]
  %s11 = inlined_call_operand.hbm [shape: bf16[512,128], index: 11, kind: input, shape index: {}]
  %s12 = inlined_call_operand.vmem [shape: f32[1,128], index: 12, kind: input, shape index: {}]
  %s13 = inlined_call_operand.vmem [shape: bf16[1,128], index: 13, kind: input, shape index: {}]
  %s14 = inlined_call_operand.<no memory space> [shape: f32[1,1], index: 14, kind: input, shape index: {}]
  %s15 = inlined_call_operand.hbm [shape: f32[2,16,512], index: 15, kind: output, shape index: {}]
  %s16 = sld [smem:[#allocation0]]
  $region109: #{tpu_custom_call.1} parent=0
    _
  %s18 = ssub.s32 1, %s16
  %s19 = scalar_select 0, %s18, %s16
  %v20 = vstv %s14
  %21 = vst [vmem:[#allocation2] sm:$0x1] %v20
  $region1: #{tpu_custom_call.1} parent=0
    #allocation3 [shape = 'u8[65536]{0}', space=vmem, size = 0x10000, scoped, tag = 'input window, operand 5, single buffered']
    #allocation4 [shape = 's32[2]{0}', space=sflag, size = 0x8, scoped, tag = 'scoped memory for tpu_custom_call.1']
    #allocation5 [shape = 's32[2]{0}', space=sflag, size = 0x8, scoped, tag = 'scoped memory for tpu_custom_call.1']
    #allocation6 [shape = 'u8[131072]{0}', space=vmem, size = 0x20000, scoped, tag = 'input window, operand 7, single buffered']
    #allocation7 [shape = 's32[1]{0}', space=sflag, size = 0x4, scoped, tag = 'scoped memory for tpu_custom_call.1']
    #allocation8 [shape = 'u8[131072]{0}', space=vmem, size = 0x20000, scoped, tag = 'input window, operand 9, single buffered']
    #allocation9 [shape = 'u8[131072]{0}', space=vmem, size = 0x20000, scoped, tag = 'input window, operand 11, single buffered']
    #allocation10 [shape = 's32[1]{0}', space=sflag, size = 0x4, scoped, tag = 'scoped memory for tpu_custom_call.1']
    #allocation11 [shape = 'u8[65536]{0}', space=vmem, size = 0x10000, scoped, tag = 'output window, operand 0']
    %22 = vsyncpa [#allocation4], 0
    %23 = vsyncpa [#allocation7], 0
    %24 = vsyncpa [#allocation10], 0
    %25 = vsyncpa [#allocation5], 0
    %s26 = scalar_lea.sflag [#allocation5], 1
    %27 = vsyncpa %s26, 0
    loop: start=0, step=1, limit=4
    $region2: #{tpu_custom_call.1} parent=1 // loop_pre_header
      _
    $region3: #{tpu_custom_call.1} parent=1 // loop_header
      %s29 = sphi 0, %s33
      %p30 = scmp.ge.s32.totalorder %s29, 4
      %s39 = sphi 0, %s41
      %s42 = sphi 0, %s39
      %s43 = sphi 0, %s42
      %s59 = sphi 0, %s43
      %s65 = sphi 0, %s67
      %s68 = sphi 0, %s65
      %s69 = sphi 0, %s68
      %s85 = sphi 0, %s69
      %s89 = sphi 0, %s89
      %s91 = sphi 0, %s89
      %s92 = sphi 0, %s91
      %s106 = sphi 0, %s92
      %s110 = sphi 0, %s110
      %s112 = sphi 0, %s110
      %s113 = sphi 0, %s112
      %s127 = sphi 0, %s113
      %s131 = sphi 0, %s131
      %s133 = sphi 0, %s131
      %s134 = sphi 0, %s133
      %s148 = sphi 0, %s134
      %s152 = sphi 0, %s152
      %s154 = sphi 0, %s152
      %s155 = sphi 0, %s154
      %s169 = sphi 0, %s155
      %s173 = sphi 0, %s173
      %s175 = sphi 0, %s173
      %s176 = sphi 0, %s175
      %s190 = sphi 0, %s176
      %s194 = sphi 0, %s194
      %s196 = sphi 0, %s194
      %s197 = sphi 0, %s196
      %s211 = sphi 0, %s197
      %s215 = sphi 0, %s215
      %s217 = sphi 0, %s215
      %s218 = sphi 0, %s217
      %s232 = sphi 0, %s218
      %s236 = sphi 0, %s236
      %s238 = sphi 0, %s236
      %s239 = sphi 0, %s238
      %s253 = sphi 0, %s239
      %s257 = sphi 0, %s257
      %s259 = sphi 0, %s257
      %s260 = sphi 0, %s259
      %s274 = sphi 0, %s260
      %s278 = sphi 0, %s278
      %s280 = sphi 0, %s278
      %s281 = sphi 0, %s280
      %s295 = sphi 0, %s281
      %s299 = sphi 0, %s299
      %s301 = sphi 0, %s299
      %s302 = sphi 0, %s301
      %s316 = sphi 0, %s302
      %s320 = sphi 0, %s320
      %s322 = sphi 0, %s320
      %s323 = sphi 0, %s322
      %s337 = sphi 0, %s323
      %s341 = sphi 0, %s341
      %s343 = sphi 0, %s341
      %s344 = sphi 0, %s343
      %s358 = sphi 0, %s344
      %s364 = sphi 0, %s366
      %s367 = sphi 0, %s364
      %s368 = sphi 0, %s367
      %s384 = sphi 0, %s368
    $region4: #{tpu_custom_call.1} parent=1 // loop_header_branch
      %32 = sbr.rel (%p30) target = $region8
    $region5: #{tpu_custom_call.1} parent=1 // loop_body
      %s34 = ssub.s32 %s29, 1
      %s35 = ssub.s32 %s29, 2
      %s36 = sadd.s32 %s29, 1
      %s37 = ssub.s32 %s29, %s36
      %p38 = scmp.eq.s32.totalorder %s37, 0
      %s40 = sadd.s32 %s39, 1
      %s41 = scalar_select %p38, %s39, %s40
      %p44 = pneg %p38
      %p45 = scmp.eq.s32.totalorder %s29, 1
      %p46 = por %p44, %p45
      %p47 = scmp.ne.s32.totalorder %s39, %s42
      %p48 = scmp.eq.s32.totalorder %s29, 0
      %p49 = por %p47, %p48
      %p50 = scmp.ne.s32.totalorder %s39, %s42
      %p51 = scmp.eq.s32.totalorder %s34, 1
      %p52 = por %p50, %p51
      %p53 = scmp.ne.s32.totalorder %s42, %s43
      %p54 = scmp.eq.s32.totalorder %s34, 0
      %p55 = por %p53, %p54
      %p56 = scmp.ne.s32.totalorder %s42, %s43
      %p57 = scmp.eq.s32.totalorder %s35, 1
      %p58 = por %p56, %p57
      %p60 = scmp.ne.s32.totalorder %s43, %s59
      %p61 = scmp.eq.s32.totalorder %s35, 0
      %p62 = por %p60, %p61
      %s63 = ssub.s32 %s29, %s36
      %p64 = scmp.eq.s32.totalorder %s63, 0
      %s66 = sadd.s32 %s65, 1
      %s67 = scalar_select %p64, %s65, %s66
      %p70 = pneg %p64
      %p71 = scmp.eq.s32.totalorder %s29, 1
      %p72 = por %p70, %p71
      %p73 = scmp.ne.s32.totalorder %s65, %s68
      %p74 = scmp.eq.s32.totalorder %s29, 0
      %p75 = por %p73, %p74
      %p76 = scmp.ne.s32.totalorder %s65, %s68
      %p77 = scmp.eq.s32.totalorder %s34, 1
      %p78 = por %p76, %p77
      %p79 = scmp.ne.s32.totalorder %s68, %s69
      %p80 = scmp.eq.s32.totalorder %s34, 0
      %p81 = por %p79, %p80
      %p82 = scmp.ne.s32.totalorder %s68, %s69
      %p83 = scmp.eq.s32.totalorder %s35, 1
      %p84 = por %p82, %p83
      %p86 = scmp.ne.s32.totalorder %s69, %s85
      %p87 = scmp.eq.s32.totalorder %s35, 0
      %p88 = por %p86, %p87
      %s90 = sadd.s32 %s89, 1
      %p93 = scmp.eq.s32.totalorder %s29, 1
      %p94 = scmp.ne.s32.totalorder %s89, %s91
      %p95 = scmp.eq.s32.totalorder %s29, 0
      %p96 = por %p94, %p95
      %p97 = scmp.ne.s32.totalorder %s89, %s91
      %p98 = scmp.eq.s32.totalorder %s34, 1
      %p99 = por %p97, %p98
      %p100 = scmp.ne.s32.totalorder %s91, %s92
      %p101 = scmp.eq.s32.totalorder %s34, 0
      %p102 = por %p100, %p101
      %p103 = scmp.ne.s32.totalorder %s91, %s92
      %p104 = scmp.eq.s32.totalorder %s35, 1
      %p105 = por %p103, %p104
      %p107 = scmp.ne.s32.totalorder %s92, %s106
      %p108 = scmp.eq.s32.totalorder %s35, 0
      %p109 = por %p107, %p108
      %s111 = sadd.s32 %s110, 1
      %p114 = scmp.eq.s32.totalorder %s29, 1
      %p115 = scmp.ne.s32.totalorder %s110, %s112
      %p116 = scmp.eq.s32.totalorder %s29, 0
      %p117 = por %p115, %p116
      %p118 = scmp.ne.s32.totalorder %s110, %s112
      %p119 = scmp.eq.s32.totalorder %s34, 1
      %p120 = por %p118, %p119
      %p121 = scmp.ne.s32.totalorder %s112, %s113
      %p122 = scmp.eq.s32.totalorder %s34, 0
      %p123 = por %p121, %p122
      %p124 = scmp.ne.s32.totalorder %s112, %s113
      %p125 = scmp.eq.s32.totalorder %s35, 1
      %p126 = por %p124, %p125
      %p128 = scmp.ne.s32.totalorder %s113, %s127
      %p129 = scmp.eq.s32.totalorder %s35, 0
      %p130 = por %p128, %p129
      %s132 = sadd.s32 %s131, 1
      %p135 = scmp.eq.s32.totalorder %s29, 1
      %p136 = scmp.ne.s32.totalorder %s131, %s133
      %p137 = scmp.eq.s32.totalorder %s29, 0
      %p138 = por %p136, %p137
      %p139 = scmp.ne.s32.totalorder %s131, %s133
      %p140 = scmp.eq.s32.totalorder %s34, 1
      %p141 = por %p139, %p140
      %p142 = scmp.ne.s32.totalorder %s133, %s134
      %p143 = scmp.eq.s32.totalorder %s34, 0
      %p144 = por %p142, %p143
      %p145 = scmp.ne.s32.totalorder %s133, %s134
      %p146 = scmp.eq.s32.totalorder %s35, 1
      %p147 = por %p145, %p146
      %p149 = scmp.ne.s32.totalorder %s134, %s148
      %p150 = scmp.eq.s32.totalorder %s35, 0
      %p151 = por %p149, %p150
      %s153 = sadd.s32 %s152, 1
      %p156 = scmp.eq.s32.totalorder %s29, 1
      %p157 = scmp.ne.s32.totalorder %s152, %s154
      %p158 = scmp.eq.s32.totalorder %s29, 0
      %p159 = por %p157, %p158
      %p160 = scmp.ne.s32.totalorder %s152, %s154
      %p161 = scmp.eq.s32.totalorder %s34, 1
      %p162 = por %p160, %p161
      %p163 = scmp.ne.s32.totalorder %s154, %s155
      %p164 = scmp.eq.s32.totalorder %s34, 0
      %p165 = por %p163, %p164
      %p166 = scmp.ne.s32.totalorder %s154, %s155
      %p167 = scmp.eq.s32.totalorder %s35, 1
      %p168 = por %p166, %p167
      %p170 = scmp.ne.s32.totalorder %s155, %s169
      %p171 = scmp.eq.s32.totalorder %s35, 0
      %p172 = por %p170, %p171
      %s174 = sadd.s32 %s173, 1
      %p177 = scmp.eq.s32.totalorder %s29, 1
      %p178 = scmp.ne.s32.totalorder %s173, %s175
      %p179 = scmp.eq.s32.totalorder %s29, 0
      %p180 = por %p178, %p179
      %p181 = scmp.ne.s32.totalorder %s173, %s175
      %p182 = scmp.eq.s32.totalorder %s34, 1
      %p183 = por %p181, %p182
      %p184 = scmp.ne.s32.totalorder %s175, %s176
      %p185 = scmp.eq.s32.totalorder %s34, 0
      %p186 = por %p184, %p185
      %p187 = scmp.ne.s32.totalorder %s175, %s176
      %p188 = scmp.eq.s32.totalorder %s35, 1
      %p189 = por %p187, %p188
      %p191 = scmp.ne.s32.totalorder %s176, %s190
      %p192 = scmp.eq.s32.totalorder %s35, 0
      %p193 = por %p191, %p192
      %s195 = sadd.s32 %s194, 1
      %p198 = scmp.eq.s32.totalorder %s29, 1
      %p199 = scmp.ne.s32.totalorder %s194, %s196
      %p200 = scmp.eq.s32.totalorder %s29, 0
      %p201 = por %p199, %p200
      %p202 = scmp.ne.s32.totalorder %s194, %s196
      %p203 = scmp.eq.s32.totalorder %s34, 1
      %p204 = por %p202, %p203
      %p205 = scmp.ne.s32.totalorder %s196, %s197
      %p206 = scmp.eq.s32.totalorder %s34, 0
      %p207 = por %p205, %p206
      %p208 = scmp.ne.s32.totalorder %s196, %s197
      %p209 = scmp.eq.s32.totalorder %s35, 1
      %p210 = por %p208, %p209
      %p212 = scmp.ne.s32.totalorder %s197, %s211
      %p213 = scmp.eq.s32.totalorder %s35, 0
      %p214 = por %p212, %p213
      %s216 = sadd.s32 %s215, 1
      %p219 = scmp.eq.s32.totalorder %s29, 1
      %p220 = scmp.ne.s32.totalorder %s215, %s217
      %p221 = scmp.eq.s32.totalorder %s29, 0
      %p222 = por %p220, %p221
      %p223 = scmp.ne.s32.totalorder %s215, %s217
      %p224 = scmp.eq.s32.totalorder %s34, 1
      %p225 = por %p223, %p224
      %p226 = scmp.ne.s32.totalorder %s217, %s218
      %p227 = scmp.eq.s32.totalorder %s34, 0
      %p228 = por %p226, %p227
      %p229 = scmp.ne.s32.totalorder %s217, %s218
      %p230 = scmp.eq.s32.totalorder %s35, 1
      %p231 = por %p229, %p230
      %p233 = scmp.ne.s32.totalorder %s218, %s232
      %p234 = scmp.eq.s32.totalorder %s35, 0
      %p235 = por %p233, %p234
      %s237 = sadd.s32 %s236, 1
      %p240 = scmp.eq.s32.totalorder %s29, 1
      %p241 = scmp.ne.s32.totalorder %s236, %s238
      %p242 = scmp.eq.s32.totalorder %s29, 0
      %p243 = por %p241, %p242
      %p244 = scmp.ne.s32.totalorder %s236, %s238
      %p245 = scmp.eq.s32.totalorder %s34, 1
      %p246 = por %p244, %p245
      %p247 = scmp.ne.s32.totalorder %s238, %s239
      %p248 = scmp.eq.s32.totalorder %s34, 0
      %p249 = por %p247, %p248
      %p250 = scmp.ne.s32.totalorder %s238, %s239
      %p251 = scmp.eq.s32.totalorder %s35, 1
      %p252 = por %p250, %p251
      %p254 = scmp.ne.s32.totalorder %s239, %s253
      %p255 = scmp.eq.s32.totalorder %s35, 0
      %p256 = por %p254, %p255
      %s258 = sadd.s32 %s257, 1
      %p261 = scmp.eq.s32.totalorder %s29, 1
      %p262 = scmp.ne.s32.totalorder %s257, %s259
      %p263 = scmp.eq.s32.totalorder %s29, 0
      %p264 = por %p262, %p263
      %p265 = scmp.ne.s32.totalorder %s257, %s259
      %p266 = scmp.eq.s32.totalorder %s34, 1
      %p267 = por %p265, %p266
      %p268 = scmp.ne.s32.totalorder %s259, %s260
      %p269 = scmp.eq.s32.totalorder %s34, 0
      %p270 = por %p268, %p269
      %p271 = scmp.ne.s32.totalorder %s259, %s260
      %p272 = scmp.eq.s32.totalorder %s35, 1
      %p273 = por %p271, %p272
      %p275 = scmp.ne.s32.totalorder %s260, %s274
      %p276 = scmp.eq.s32.totalorder %s35, 0
      %p277 = por %p275, %p276
      %s279 = sadd.s32 %s278, 1
      %p282 = scmp.eq.s32.totalorder %s29, 1
      %p283 = scmp.ne.s32.totalorder %s278, %s280
      %p284 = scmp.eq.s32.totalorder %s29, 0
      %p285 = por %p283, %p284
      %p286 = scmp.ne.s32.totalorder %s278, %s280
      %p287 = scmp.eq.s32.totalorder %s34, 1
      %p288 = por %p286, %p287
      %p289 = scmp.ne.s32.totalorder %s280, %s281
      %p290 = scmp.eq.s32.totalorder %s34, 0
      %p291 = por %p289, %p290
      %p292 = scmp.ne.s32.totalorder %s280, %s281
      %p293 = scmp.eq.s32.totalorder %s35, 1
      %p294 = por %p292, %p293
      %p296 = scmp.ne.s32.totalorder %s281, %s295
      %p297 = scmp.eq.s32.totalorder %s35, 0
      %p298 = por %p296, %p297
      %s300 = sadd.s32 %s299, 1
      %p303 = scmp.eq.s32.totalorder %s29, 1
      %p304 = scmp.ne.s32.totalorder %s299, %s301
      %p305 = scmp.eq.s32.totalorder %s29, 0
      %p306 = por %p304, %p305
      %p307 = scmp.ne.s32.totalorder %s299, %s301
      %p308 = scmp.eq.s32.totalorder %s34, 1
      %p309 = por %p307, %p308
      %p310 = scmp.ne.s32.totalorder %s301, %s302
      %p311 = scmp.eq.s32.totalorder %s34, 0
      %p312 = por %p310, %p311
      %p313 = scmp.ne.s32.totalorder %s301, %s302
      %p314 = scmp.eq.s32.totalorder %s35, 1
      %p315 = por %p313, %p314
      %p317 = scmp.ne.s32.totalorder %s302, %s316
      %p318 = scmp.eq.s32.totalorder %s35, 0
      %p319 = por %p317, %p318
      %s321 = sadd.s32 %s320, 1
      %p324 = scmp.eq.s32.totalorder %s29, 1
      %p325 = scmp.ne.s32.totalorder %s320, %s322
      %p326 = scmp.eq.s32.totalorder %s29, 0
      %p327 = por %p325, %p326
      %p328 = scmp.ne.s32.totalorder %s320, %s322
      %p329 = scmp.eq.s32.totalorder %s34, 1
      %p330 = por %p328, %p329
      %p331 = scmp.ne.s32.totalorder %s322, %s323
      %p332 = scmp.eq.s32.totalorder %s34, 0
      %p333 = por %p331, %p332
      %p334 = scmp.ne.s32.totalorder %s322, %s323
      %p335 = scmp.eq.s32.totalorder %s35, 1
      %p336 = por %p334, %p335
      %p338 = scmp.ne.s32.totalorder %s323, %s337
      %p339 = scmp.eq.s32.totalorder %s35, 0
      %p340 = por %p338, %p339
      %s342 = sadd.s32 %s341, 1
      %p345 = scmp.eq.s32.totalorder %s29, 1
      %p346 = scmp.ne.s32.totalorder %s341, %s343
      %p347 = scmp.eq.s32.totalorder %s29, 0
      %p348 = por %p346, %p347
      %p349 = scmp.ne.s32.totalorder %s341, %s343
      %p350 = scmp.eq.s32.totalorder %s34, 1
      %p351 = por %p349, %p350
      %p352 = scmp.ne.s32.totalorder %s343, %s344
      %p353 = scmp.eq.s32.totalorder %s34, 0
      %p354 = por %p352, %p353
      %p355 = scmp.ne.s32.totalorder %s343, %s344
      %p356 = scmp.eq.s32.totalorder %s35, 1
      %p357 = por %p355, %p356
      %p359 = scmp.ne.s32.totalorder %s344, %s358
      %p360 = scmp.eq.s32.totalorder %s35, 0
      %p361 = por %p359, %p360
      %s362 = ssub.s32 %s29, %s36
      %p363 = scmp.eq.s32.totalorder %s362, 0
      %s365 = sadd.s32 %s364, 1
      %s366 = scalar_select %p363, %s364, %s365
      %p369 = pneg %p363
      %p370 = scmp.eq.s32.totalorder %s29, 1
      %p371 = por %p369, %p370
      %p372 = scmp.ne.s32.totalorder %s364, %s367
      %p373 = scmp.eq.s32.totalorder %s29, 0
      %p374 = por %p372, %p373
      %p375 = scmp.ne.s32.totalorder %s364, %s367
      %p376 = scmp.eq.s32.totalorder %s34, 1
      %p377 = por %p375, %p376
      %p378 = scmp.ne.s32.totalorder %s367, %s368
      %p379 = scmp.eq.s32.totalorder %s34, 0
      %p380 = por %p378, %p379
      %p381 = scmp.ne.s32.totalorder %s367, %s368
      %p382 = scmp.eq.s32.totalorder %s35, 1
      %p383 = por %p381, %p382
      %p385 = scmp.ne.s32.totalorder %s368, %s384
      %p386 = scmp.eq.s32.totalorder %s35, 0
      %p387 = por %p385, %p386
      %p388 = scmp.le.s32.totalorder 1, %s29
      %p389 = scmp.lt.s32.totalorder %s29, 3
      %p390 = pnand %p388, %p389
      %p391 = pneg %p390
      // Predicated region
      $region9: #{tpu_custom_call.1} parent=5 // pred_check
        _
      $region10: #{tpu_custom_call.1} parent=5 // pred_check_branch
        %393 = sbr.rel (%p390) target = $region12
      $region11: #{tpu_custom_call.1} parent=5 // pred_region
        %s394 = ssub.s32 %s29, 1
        // Predicated region
        $region13: #{tpu_custom_call.1} parent=11 // pred_check
          %p395 = pneg %p102
        $region14: #{tpu_custom_call.1} parent=11 // pred_check_branch
          %397 = sbr.rel (%p395) target = $region16
        $region15: #{tpu_custom_call.1} parent=11 // pred_region
          _
        $region16: #{tpu_custom_call.1} parent=11 // pred_fallthru
          _
        // Predicated region
        $region17: #{tpu_custom_call.1} parent=11 // pred_check
          %p398 = pneg %p123
        $region18: #{tpu_custom_call.1} parent=11 // pred_check_branch
          %400 = sbr.rel (%p398) target = $region20
        $region19: #{tpu_custom_call.1} parent=11 // pred_region
          _
        $region20: #{tpu_custom_call.1} parent=11 // pred_fallthru
          _
        // Predicated region
        $region21: #{tpu_custom_call.1} parent=11 // pred_check
          %p401 = pneg %p144
        $region22: #{tpu_custom_call.1} parent=11 // pred_check_branch
          %403 = sbr.rel (%p401) target = $region24
        $region23: #{tpu_custom_call.1} parent=11 // pred_region
          _
        $region24: #{tpu_custom_call.1} parent=11 // pred_fallthru
          _
        // Predicated region
        $region25: #{tpu_custom_call.1} parent=11 // pred_check
          %p404 = pneg %p165
        $region26: #{tpu_custom_call.1} parent=11 // pred_check_branch
          %406 = sbr.rel (%p404) target = $region28
        $region27: #{tpu_custom_call.1} parent=11 // pred_region
          %s408 = ssub.s32 2048, 2048
          %409 = vsyncadd [#allocation4], %s408
          %s410 = sshll.u32 [#allocation3], 4
          %s411 = int_to_ptr.vmem [resolvable:$true] %s410
          %416 = dma.hbm_to_vmem [thread:$0]  %s5, 2048, %s411, [#allocation4], 128, 128, 8
        $region28: #{tpu_custom_call.1} parent=11 // pred_fallthru
          _
        // Predicated region
        $region29: #{tpu_custom_call.1} parent=11 // pred_check
          %p417 = pneg %p186
        $region30: #{tpu_custom_call.1} parent=11 // pred_check_branch
          %419 = sbr.rel (%p417) target = $region32
        $region31: #{tpu_custom_call.1} parent=11 // pred_region
          _
        $region32: #{tpu_custom_call.1} parent=11 // pred_fallthru
          _
        // Predicated region
        $region33: #{tpu_custom_call.1} parent=11 // pred_check
          %p420 = pneg %p207
        $region34: #{tpu_custom_call.1} parent=11 // pred_check_branch
          %422 = sbr.rel (%p420) target = $region36
        $region35: #{tpu_custom_call.1} parent=11 // pred_region
          %s424 = ssub.s32 4096, 4096
          %425 = vsyncadd [#allocation7], %s424
          %s426 = sshll.u32 [#allocation6], 4
          %s427 = int_to_ptr.vmem [resolvable:$true] %s426
          %432 = dma.hbm_to_vmem [thread:$0]  %s7, 4096, %s427, [#allocation7], 128, 128, 8
        $region36: #{tpu_custom_call.1} parent=11 // pred_fallthru
          _
        // Predicated region
        $region37: #{tpu_custom_call.1} parent=11 // pred_check
          %p433 = pneg %p228
        $region38: #{tpu_custom_call.1} parent=11 // pred_check_branch
          %435 = sbr.rel (%p433) target = $region40
        $region39: #{tpu_custom_call.1} parent=11 // pred_region
          _
        $region40: #{tpu_custom_call.1} parent=11 // pred_fallthru
          _
        // Predicated region
        $region41: #{tpu_custom_call.1} parent=11 // pred_check
          %p436 = pneg %p249
        $region42: #{tpu_custom_call.1} parent=11 // pred_check_branch
          %438 = sbr.rel (%p436) target = $region44
        $region43: #{tpu_custom_call.1} parent=11 // pred_region
          %s440 = ssub.s32 4096, 4096
          %441 = vsyncadd [#allocation7], %s440
          %s442 = sshll.u32 [#allocation8], 4
          %s443 = int_to_ptr.vmem [resolvable:$true] %s442
          %448 = dma.hbm_to_vmem [thread:$0]  %s9, 4096, %s443, [#allocation7], 128, 128, 8
        $region44: #{tpu_custom_call.1} parent=11 // pred_fallthru
          _
        // Predicated region
        $region45: #{tpu_custom_call.1} parent=11 // pred_check
          %p449 = pneg %p270
        $region46: #{tpu_custom_call.1} parent=11 // pred_check_branch
          %451 = sbr.rel (%p449) target = $region48
        $region47: #{tpu_custom_call.1} parent=11 // pred_region
          _
        $region48: #{tpu_custom_call.1} parent=11 // pred_fallthru
          _
        // Predicated region
        $region49: #{tpu_custom_call.1} parent=11 // pred_check
          %p452 = pneg %p291
        $region50: #{tpu_custom_call.1} parent=11 // pred_check_branch
          %454 = sbr.rel (%p452) target = $region52
        $region51: #{tpu_custom_call.1} parent=11 // pred_region
          %s456 = ssub.s32 4096, 4096
          %457 = vsyncadd [#allocation10], %s456
          %s458 = sshll.u32 [#allocation9], 4
          %s459 = int_to_ptr.vmem [resolvable:$true] %s458
          %464 = dma.hbm_to_vmem [thread:$0]  %s11, 4096, %s459, [#allocation10], 64, 64, 4
        $region52: #{tpu_custom_call.1} parent=11 // pred_fallthru
          _
        // Predicated region
        $region53: #{tpu_custom_call.1} parent=11 // pred_check
          %p465 = pneg %p312
        $region54: #{tpu_custom_call.1} parent=11 // pred_check_branch
          %467 = sbr.rel (%p465) target = $region56
        $region55: #{tpu_custom_call.1} parent=11 // pred_region
          _
        $region56: #{tpu_custom_call.1} parent=11 // pred_fallthru
          _
        // Predicated region
        $region57: #{tpu_custom_call.1} parent=11 // pred_check
          %p468 = pneg %p333
        $region58: #{tpu_custom_call.1} parent=11 // pred_check_branch
          %470 = sbr.rel (%p468) target = $region60
        $region59: #{tpu_custom_call.1} parent=11 // pred_region
          _
        $region60: #{tpu_custom_call.1} parent=11 // pred_fallthru
          _
        // Predicated region
        $region61: #{tpu_custom_call.1} parent=11 // pred_check
          %p471 = pneg %p354
        $region62: #{tpu_custom_call.1} parent=11 // pred_check_branch
          %473 = sbr.rel (%p471) target = $region64
        $region63: #{tpu_custom_call.1} parent=11 // pred_region
          _
        $region64: #{tpu_custom_call.1} parent=11 // pred_fallthru
          _
      $region12: #{tpu_custom_call.1} parent=5 // pred_fallthru
        _
      %p474 = scmp.lt.s32.totalorder %s29, 2
      // Predicated region
      $region65: #{tpu_custom_call.1} parent=5 // pred_check
        %p475 = pneg %p474
      $region66: #{tpu_custom_call.1} parent=5 // pred_check_branch
        %477 = sbr.rel (%p475) target = $region68
      $region67: #{tpu_custom_call.1} parent=5 // pred_region
        // Predicated region
        $region69: #{tpu_custom_call.1} parent=67 // pred_check
          %p478 = pneg %p49
        $region70: #{tpu_custom_call.1} parent=67 // pred_check_branch
          %480 = sbr.rel (%p478) target = $region72
        $region71: #{tpu_custom_call.1} parent=67 // pred_region
          %s481 = smul.u32 16, %s29
          %p482 = scmp.lt.s32.totalorder %s481, 31
          %s483 = scalar_select %p482, %s481, 31
          %s484 = smul.addr %s483, 4
          %s485 = scalar_lea.vmem %s0, %s484
          %s486 = smul.u32 16, %s29
        $region72: #{tpu_custom_call.1} parent=67 // pred_fallthru
          _
        // Predicated region
        $region73: #{tpu_custom_call.1} parent=67 // pred_check
          %p487 = pneg %p75
        $region74: #{tpu_custom_call.1} parent=67 // pred_check_branch
          %489 = sbr.rel (%p487) target = $region76
        $region75: #{tpu_custom_call.1} parent=67 // pred_region
          %s490 = smul.u32 16, %s29
          %p491 = scmp.lt.s32.totalorder %s490, 31
          %s492 = scalar_select %p491, %s490, 31
          %s493 = smul.addr %s492, 4
          %s494 = scalar_lea.vmem %s1, %s493
          %s495 = smul.u32 16, %s29
        $region76: #{tpu_custom_call.1} parent=67 // pred_fallthru
          _
      $region68: #{tpu_custom_call.1} parent=5 // pred_fallthru
        _
      %p496 = scmp.le.s32.totalorder 1, %s29
      %p497 = scmp.lt.s32.totalorder %s29, 3
      %p498 = pnand %p496, %p497
      %p499 = pneg %p498
      // Predicated region
      $region77: #{tpu_custom_call.1} parent=5 // pred_check
        _
      $region78: #{tpu_custom_call.1} parent=5 // pred_check_branch
        %501 = sbr.rel (%p498) target = $region80
      $region79: #{tpu_custom_call.1} parent=5 // pred_region
        %s502 = ssub.s32 %s29, 1
        // Predicated region
        $region81: #{tpu_custom_call.1} parent=79 // pred_check
          %p503 = pneg %p165
        $region82: #{tpu_custom_call.1} parent=79 // pred_check_branch
          %505 = sbr.rel (%p503) target = $region84
        $region83: #{tpu_custom_call.1} parent=79 // pred_region
          %506 = dma.done [#allocation4], 2048
        $region84: #{tpu_custom_call.1} parent=79 // pred_fallthru
          _
        // Predicated region
        $region85: #{tpu_custom_call.1} parent=79 // pred_check
          %p507 = pneg %p207
        $region86: #{tpu_custom_call.1} parent=79 // pred_check_branch
          %509 = sbr.rel (%p507) target = $region88
        $region87: #{tpu_custom_call.1} parent=79 // pred_region
          %510 = dma.done [#allocation7], 4096
        $region88: #{tpu_custom_call.1} parent=79 // pred_fallthru
          _
        // Predicated region
        $region89: #{tpu_custom_call.1} parent=79 // pred_check
          %p511 = pneg %p249
        $region90: #{tpu_custom_call.1} parent=79 // pred_check_branch
          %513 = sbr.rel (%p511) target = $region92
        $region91: #{tpu_custom_call.1} parent=79 // pred_region
          %514 = dma.done [#allocation7], 4096
        $region92: #{tpu_custom_call.1} parent=79 // pred_fallthru
          _
        // Predicated region
        $region93: #{tpu_custom_call.1} parent=79 // pred_check
          %p515 = pneg %p291
        $region94: #{tpu_custom_call.1} parent=79 // pred_check_branch
          %517 = sbr.rel (%p515) target = $region96
        $region95: #{tpu_custom_call.1} parent=79 // pred_region
          %518 = dma.done [#allocation10], 4096
        $region96: #{tpu_custom_call.1} parent=79 // pred_fallthru
          _
        %s519 = smul.u32 16, %s34
        %p520 = scmp.lt.s32.totalorder %s519, 31
        %s521 = scalar_select %p520, %s519, 31
        %s522 = smul.addr %s521, 4
        %s523 = scalar_lea.vmem %s0, %s522
        %p524 = pneg %p55
        %p525 = pneg %p52
        %s526 = smul.u32 16, %s34
        %p527 = scmp.lt.s32.totalorder %s526, 31
        %s528 = scalar_select %p527, %s526, 31
        %s529 = smul.addr %s528, 4
        %s530 = scalar_lea.vmem %s1, %s529
        %p531 = pneg %p81
        %p532 = pneg %p78
        %p533 = pneg %p102
        %p534 = pneg %p99
        %p535 = pneg %p123
        %p536 = pneg %p120
        %p537 = pneg %p144
        %p538 = pneg %p141
        %p539 = pneg %p165
        %p540 = pneg %p162
        %p541 = pneg %p186
        %p542 = pneg %p183
        %p543 = pneg %p207
        %p544 = pneg %p204
        %p545 = pneg %p228
        %p546 = pneg %p225
        %p547 = pneg %p249
        %p548 = pneg %p246
        %p549 = pneg %p270
        %p550 = pneg %p267
        %p551 = pneg %p291
        %p552 = pneg %p288
        %p553 = pneg %p312
        %p554 = pneg %p309
        %p555 = pneg %p333
        %p556 = pneg %p330
        %p557 = pneg %p354
        %p558 = pneg %p351
        %p559 = pneg %p380
        %p560 = pneg %p377
        %s561 = sand.u32 %s367, 1
        %s562 = scalar_lea.sflag [#allocation5], %s561
        %s563 = sand.u32 %s367, 1
        %s564 = smul.addr %s563, 64
        %s565 = scalar_lea.vmem [#allocation11], %s564
        %s566 = smul.u32 16, %s34
        %p567 = scmp.lt.s32.totalorder %s566, 31
        %s568 = scalar_select %p567, %s566, 31
        %s569 = smul.addr %s568, 4
        %s570 = scalar_lea.vmem %s0, %s569
        %s571 = smul.u32 16, %s34
        %s572 = smul.u32 16, %s34
        %p573 = scmp.lt.s32.totalorder %s572, 31
        %s574 = scalar_select %p573, %s572, 31
        %s575 = smul.addr %s574, 4
        %s576 = scalar_lea.vmem %s1, %s575
        %s577 = smul.u32 16, %s34
        %v579 = vld [vmem:[%s570] sm:$0xf]
        %v580 = vld [vmem:[%s570 + $0x4] sm:$0xf]
        %v581 = vld [vmem:[%s570 + $0x8] sm:$0xf]
        %v582 = vld [vmem:[%s570 + $0xc] sm:$0xf]
        %v583 = vld [vmem:[%s570 + $0x10] sm:$0xf]
        %v584 = vld [vmem:[%s570 + $0x14] sm:$0xf]
        %v585 = vld [vmem:[%s570 + $0x18] sm:$0xf]
        %v586 = vld [vmem:[%s570 + $0x1c] sm:$0xf]
        %v587 = vld [vmem:[%s570 + $0x20] sm:$0xf]
        %v588 = vld [vmem:[%s570 + $0x24] sm:$0xf]
        %v589 = vld [vmem:[%s570 + $0x28] sm:$0xf]
        %v590 = vld [vmem:[%s570 + $0x2c] sm:$0xf]
        %v591 = vld [vmem:[%s570 + $0x30] sm:$0xf]
        %v592 = vld [vmem:[%s570 + $0x34] sm:$0xf]
        %v593 = vld [vmem:[%s570 + $0x38] sm:$0xf]
        %v594 = vld [vmem:[%s570 + $0x3c] sm:$0xf]
        %v595 = vld [vmem:[%s576] sm:$0xf]
        %v596 = vld [vmem:[%s576 + $0x4] sm:$0xf]
        %v597 = vld [vmem:[%s576 + $0x8] sm:$0xf]
        %v598 = vld [vmem:[%s576 + $0xc] sm:$0xf]
        %v599 = vld [vmem:[%s576 + $0x10] sm:$0xf]
        %v600 = vld [vmem:[%s576 + $0x14] sm:$0xf]
        %v601 = vld [vmem:[%s576 + $0x18] sm:$0xf]
        %v602 = vld [vmem:[%s576 + $0x1c] sm:$0xf]
        %v603 = vld [vmem:[%s576 + $0x20] sm:$0xf]
        %v604 = vld [vmem:[%s576 + $0x24] sm:$0xf]
        %v605 = vld [vmem:[%s576 + $0x28] sm:$0xf]
        %v606 = vld [vmem:[%s576 + $0x2c] sm:$0xf]
        %v607 = vld [vmem:[%s576 + $0x30] sm:$0xf]
        %v608 = vld [vmem:[%s576 + $0x34] sm:$0xf]
        %v609 = vld [vmem:[%s576 + $0x38] sm:$0xf]
        %v610 = vld [vmem:[%s576 + $0x3c] sm:$0xf]
        %v611 = vld [vmem:[%s3] sm:$0xf]
        %v612 = vld [vmem:[%s3 + $0x4] sm:$0xf]
        %v613 = vld [vmem:[%s3 + $0x8] sm:$0xf]
        %v614 = vld [vmem:[%s3 + $0xc] sm:$0xf]
        %v615 = vld [vmem:[%s4] sm:$0x1]
        %v617 = vlaneseq
        %v618 = vshrl.u32 %v617, 7
        %v619 = vsub.s32 0, %v618
        %v620 = vrot.slane %v615, %v619
        %v638 = vunpack.c.l.b16 %v579
        %v639 = vunpack.c.l.b16 %v580
        %v640 = vunpack.c.l.b16 %v581
        %v641 = vunpack.c.l.b16 %v582
        %v642 = vunpack.c.l.b16 %v583
        %v643 = vunpack.c.l.b16 %v584
        %v644 = vunpack.c.l.b16 %v585
        %v645 = vunpack.c.l.b16 %v586
        %v646 = vunpack.c.l.b16 %v587
        %v647 = vunpack.c.l.b16 %v588
        %v648 = vunpack.c.l.b16 %v589
        %v649 = vunpack.c.l.b16 %v590
        %v650 = vunpack.c.l.b16 %v591
        %v651 = vunpack.c.l.b16 %v592
        %v652 = vunpack.c.l.b16 %v593
        %v653 = vunpack.c.l.b16 %v594
        %v654 = vpack.c.b16 %v639, %v638
        %v655 = vpack.c.b16 %v641, %v640
        %v656 = vpack.c.b16 %v643, %v642
        %v657 = vpack.c.b16 %v645, %v644
        %v658 = vpack.c.b16 %v647, %v646
        %v659 = vpack.c.b16 %v649, %v648
        %v660 = vpack.c.b16 %v651, %v650
        %v661 = vpack.c.b16 %v653, %v652
        %v666 = vunpack.c.l.b16 %v611
        %v667 = vunpack.c.l.b16 %v612
        %v668 = vunpack.c.l.b16 %v613
        %v669 = vunpack.c.l.b16 %v614
        %v670 = vpack.c.b16 %v667, %v666
        %v671 = vpack.c.b16 %v669, %v668
        %vm674 = vcmask 261120
        %v676 = vsel %vm674, %v654, 0
        %v679 = vsel %vm674, %v655, 0
        %v682 = vsel %vm674, %v656, 0
        %v685 = vsel %vm674, %v657, 0
        %v688 = vsel %vm674, %v658, 0
        %v691 = vsel %vm674, %v659, 0
        %v694 = vsel %vm674, %v660, 0
        %v697 = vsel %vm674, %v661, 0
        %699 = vmatprep.subr.bf16.mxu0 0
        %700 = vmatpush1.bf16.msra.mxu0 0
        %701 = vmatprep.subr.bf16.mxu0 0
        %702 = vmatpush1.bf16.msra.mxu0 0
        %703 = vmatprep.subr.bf16.mxu0 0
        %704 = vmatpush1.bf16.msra.mxu0 0
        %705 = vmatprep.subr.bf16.mxu0 0
        %706 = vmatpush1.bf16.msra.mxu0 0
        %707 = vmatprep.subr.bf16.mxu0 0
        %708 = vmatpush1.bf16.msra.mxu0 0
        %709 = vmatprep.subr.bf16.mxu0 0
        %710 = vmatpush1.bf16.msra.mxu0 0
        %711 = vmatprep.subr.bf16.mxu0 0
        %712 = vmatpush1.bf16.msra.mxu0 %v671
        %713 = vmatprep.subr.bf16.mxu0 0
        %714 = vmatpush1.bf16.msra.mxu0 %v670
        %715 = vmatprep.subr.bf16.mxu0 0
        %716 = vmatpush2.bf16.msra.mxu0 0
        %717 = vmatprep.subr.bf16.mxu0 0
        %718 = vmatpush2.bf16.msra.mxu0 0
        %719 = vmatprep.subr.bf16.mxu0 0
        %720 = vmatpush2.bf16.msra.mxu0 0
        %721 = vmatprep.subr.bf16.mxu0 0
        %722 = vmatpush2.bf16.msra.mxu0 0
        %723 = vmatprep.subr.bf16.mxu0 0
        %724 = vmatpush2.bf16.msra.mxu0 0
        %725 = vmatprep.subr.bf16.mxu0 0
        %726 = vmatpush2.bf16.msra.mxu0 0
        %727 = vmatprep.subr.bf16.mxu0 0
        %728 = vmatpush2.bf16.msra.mxu0 0
        %729 = vmatprep.subr.bf16.mxu0 0
        %730 = vmatpush2.bf16.msra.mxu0 0
        %731 = vmatprep.mubr.bf16.mxu0 0
        %732 = vmatmul.mubr.bf16.gmra.mxu0 %v676
        %v733 = vpop.f32.mrf.mxu0
        %v734 = vadd.f32 %v620, %v733
        %v735 = vpop.f32.mrf.mxu0
        %v736 = vpop.f32.mrf.mxu0
        %v737 = vadd.f32 %v620, %v736
        %v738 = vpop.f32.mrf.mxu0
        %739 = vmatprep.mubr.bf16.mxu0 0
        %740 = vmatmul.mubr.bf16.gmra.mxu0 %v679
        %v741 = vpop.f32.mrf.mxu0
        %v742 = vadd.f32 %v620, %v741
        %v743 = vpop.f32.mrf.mxu0
        %v744 = vpop.f32.mrf.mxu0
        %v745 = vadd.f32 %v620, %v744
        %v746 = vpop.f32.mrf.mxu0
        %747 = vmatprep.mubr.bf16.mxu0 0
        %748 = vmatmul.mubr.bf16.gmra.mxu0 %v682
        %v749 = vpop.f32.mrf.mxu0
        %v750 = vadd.f32 %v620, %v749
        %v751 = vpop.f32.mrf.mxu0
        %v752 = vpop.f32.mrf.mxu0
        %v753 = vadd.f32 %v620, %v752
        %v754 = vpop.f32.mrf.mxu0
        %755 = vmatprep.mubr.bf16.mxu0 0
        %756 = vmatmul.mubr.bf16.gmra.mxu0 %v685
        %v757 = vpop.f32.mrf.mxu0
        %v758 = vadd.f32 %v620, %v757
        %v759 = vpop.f32.mrf.mxu0
        %v760 = vpop.f32.mrf.mxu0
        %v761 = vadd.f32 %v620, %v760
        %v762 = vpop.f32.mrf.mxu0
        %763 = vmatprep.mubr.bf16.mxu0 0
        %764 = vmatmul.mubr.bf16.gmra.mxu0 %v688
        %v765 = vpop.f32.mrf.mxu0
        %v766 = vadd.f32 %v620, %v765
        %v767 = vpop.f32.mrf.mxu0
        %v768 = vpop.f32.mrf.mxu0
        %v769 = vadd.f32 %v620, %v768
        %v770 = vpop.f32.mrf.mxu0
        %771 = vmatprep.mubr.bf16.mxu0 0
        %772 = vmatmul.mubr.bf16.gmra.mxu0 %v691
        %v773 = vpop.f32.mrf.mxu0
        %v774 = vadd.f32 %v620, %v773
        %v775 = vpop.f32.mrf.mxu0
        %v776 = vpop.f32.mrf.mxu0
        %v777 = vadd.f32 %v620, %v776
        %v778 = vpop.f32.mrf.mxu0
        %779 = vmatprep.mubr.bf16.mxu0 0
        %780 = vmatmul.mubr.bf16.gmra.mxu0 %v694
        %v781 = vpop.f32.mrf.mxu0
        %v782 = vadd.f32 %v620, %v781
        %v783 = vpop.f32.mrf.mxu0
        %v784 = vpop.f32.mrf.mxu0
        %v785 = vadd.f32 %v620, %v784
        %v786 = vpop.f32.mrf.mxu0
        %787 = vmatprep.mubr.bf16.mxu0 0
        %788 = vmatmul.mubr.bf16.gmra.mxu0 %v697
        %v789 = vpop.f32.mrf.mxu0
        %v790 = vadd.f32 %v620, %v789
        %v791 = vpop.f32.mrf.mxu0
        %v792 = vpop.f32.mrf.mxu0
        %v793 = vadd.f32 %v620, %v792
        %v794 = vpop.f32.mrf.mxu0
        %795 = vdwg.mxu0
        %v796 = vmax.f32 %v734, 0.0
        %v797 = vmax.f32 %v737, 0.0
        %v798 = vmax.f32 %v742, 0.0
        %v799 = vmax.f32 %v745, 0.0
        %v800 = vmax.f32 %v750, 0.0
        %v801 = vmax.f32 %v753, 0.0
        %v802 = vmax.f32 %v758, 0.0
        %v803 = vmax.f32 %v761, 0.0
        %v804 = vmax.f32 %v766, 0.0
        %v805 = vmax.f32 %v769, 0.0
        %v806 = vmax.f32 %v774, 0.0
        %v807 = vmax.f32 %v777, 0.0
        %v808 = vmax.f32 %v782, 0.0
        %v809 = vmax.f32 %v785, 0.0
        %v810 = vmax.f32 %v790, 0.0
        %v811 = vmax.f32 %v793, 0.0
        %v812 = vpack.c.bf16 %v797, %v796
        %v813 = vpack.c.bf16 %v799, %v798
        %v814 = vpack.c.bf16 %v801, %v800
        %v815 = vpack.c.bf16 %v803, %v802
        %v816 = vpack.c.bf16 %v805, %v804
        %v817 = vpack.c.bf16 %v807, %v806
        %v818 = vpack.c.bf16 %v809, %v808
        %v819 = vpack.c.bf16 %v811, %v810
        %v820 = vld [vmem:[#allocation3] sm:$0xff]
        %v821 = vld [vmem:[#allocation3 + $0x8] sm:$0xff]
        %v822 = vld [vmem:[#allocation3 + $0x10] sm:$0xff]
        %v823 = vld [vmem:[#allocation3 + $0x18] sm:$0xff]
        %v824 = vld [vmem:[#allocation3 + $0x20] sm:$0xff]
        %v825 = vld [vmem:[#allocation3 + $0x28] sm:$0xff]
        %v826 = vld [vmem:[#allocation3 + $0x30] sm:$0xff]
        %v827 = vld [vmem:[#allocation3 + $0x38] sm:$0xff]
        %v828 = vld [vmem:[#allocation3 + $0x40] sm:$0xff]
        %v829 = vld [vmem:[#allocation3 + $0x48] sm:$0xff]
        %v830 = vld [vmem:[#allocation3 + $0x50] sm:$0xff]
        %v831 = vld [vmem:[#allocation3 + $0x58] sm:$0xff]
        %v832 = vld [vmem:[#allocation3 + $0x60] sm:$0xff]
        %v833 = vld [vmem:[#allocation3 + $0x68] sm:$0xff]
        %v834 = vld [vmem:[#allocation3 + $0x70] sm:$0xff]
        %v835 = vld [vmem:[#allocation3 + $0x78] sm:$0xff]
        %v836 = vld [vmem:[%s6] sm:$0x3]
        %v838 = vlaneseq
        %v839 = vshrl.u32 %v838, 7
        %v840 = vsub.s32 0, %v839
        %v841 = vrot.slane %v836, %v840
        %v842 = vlaneseq
        %v843 = vshrl.u32 %v842, 7
        %v844 = vsub.s32 1, %v843
        %v845 = vrot.slane %v836, %v844
        %v864 = vunpack.c.l.b16 %v820
        %v865 = vunpack.c.h.b16 %v820
        %v866 = vunpack.c.l.b16 %v821
        %v867 = vunpack.c.h.b16 %v821
        %v868 = vunpack.c.l.b16 %v822
        %v869 = vunpack.c.h.b16 %v822
        %v870 = vunpack.c.l.b16 %v823
        %v871 = vunpack.c.h.b16 %v823
        %v872 = vunpack.c.l.b16 %v824
        %v873 = vunpack.c.h.b16 %v824
        %v874 = vunpack.c.l.b16 %v825
        %v875 = vunpack.c.h.b16 %v825
        %v876 = vunpack.c.l.b16 %v826
        %v877 = vunpack.c.h.b16 %v826
        %v878 = vunpack.c.l.b16 %v827
        %v879 = vunpack.c.h.b16 %v827
        %v880 = vunpack.c.l.b16 %v828
        %v881 = vunpack.c.h.b16 %v828
        %v882 = vunpack.c.l.b16 %v829
        %v883 = vunpack.c.h.b16 %v829
        %v884 = vunpack.c.l.b16 %v830
        %v885 = vunpack.c.h.b16 %v830
        %v886 = vunpack.c.l.b16 %v831
        %v887 = vunpack.c.h.b16 %v831
        %v888 = vunpack.c.l.b16 %v832
        %v889 = vunpack.c.h.b16 %v832
        %v890 = vunpack.c.l.b16 %v833
        %v891 = vunpack.c.h.b16 %v833
        %v892 = vunpack.c.l.b16 %v834
        %v893 = vunpack.c.h.b16 %v834
        %v894 = vunpack.c.l.b16 %v835
        %v895 = vunpack.c.h.b16 %v835
        %v896 = vpack.c.b16 %v866, %v864
        %v897 = vpack.c.b16 %v867, %v865
        %v898 = vpack.c.b16 %v870, %v868
        %v899 = vpack.c.b16 %v871, %v869
        %v900 = vpack.c.b16 %v874, %v872
        %v901 = vpack.c.b16 %v875, %v873
        %v902 = vpack.c.b16 %v878, %v876
        %v903 = vpack.c.b16 %v879, %v877
        %v904 = vpack.c.b16 %v882, %v880
        %v905 = vpack.c.b16 %v883, %v881
        %v906 = vpack.c.b16 %v886, %v884
        %v907 = vpack.c.b16 %v887, %v885
        %v908 = vpack.c.b16 %v890, %v888
        %v909 = vpack.c.b16 %v891, %v889
        %v910 = vpack.c.b16 %v894, %v892
        %v911 = vpack.c.b16 %v895, %v893
        %928 = vmatprep.subr.bf16.mxu0 %v911
        %929 = vmatpush1.bf16.msra.mxu0 %v910
        %930 = vmatprep.subr.bf16.mxu0 %v909
        %931 = vmatpush1.bf16.msra.mxu0 %v908
        %932 = vmatprep.subr.bf16.mxu0 %v907
        %933 = vmatpush1.bf16.msra.mxu0 %v906
        %934 = vmatprep.subr.bf16.mxu0 %v905
        %935 = vmatpush1.bf16.msra.mxu0 %v904
        %936 = vmatprep.subr.bf16.mxu0 %v903
        %937 = vmatpush1.bf16.msra.mxu0 %v902
        %938 = vmatprep.subr.bf16.mxu0 %v901
        %939 = vmatpush1.bf16.msra.mxu0 %v900
        %940 = vmatprep.subr.bf16.mxu0 %v899
        %941 = vmatpush1.bf16.msra.mxu0 %v898
        %942 = vmatprep.subr.bf16.mxu0 %v897
        %943 = vmatpush1.bf16.msra.mxu0 %v896
        %944 = vmatprep.subr.bf16.mxu0 0
        %945 = vmatpush2.bf16.msra.mxu0 0
        %946 = vmatprep.subr.bf16.mxu0 0
        %947 = vmatpush2.bf16.msra.mxu0 0
        %948 = vmatprep.subr.bf16.mxu0 0
        %949 = vmatpush2.bf16.msra.mxu0 0
        %950 = vmatprep.subr.bf16.mxu0 0
        %951 = vmatpush2.bf16.msra.mxu0 0
        %952 = vmatprep.subr.bf16.mxu0 0
        %953 = vmatpush2.bf16.msra.mxu0 0
        %954 = vmatprep.subr.bf16.mxu0 0
        %955 = vmatpush2.bf16.msra.mxu0 0
        %956 = vmatprep.subr.bf16.mxu0 0
        %957 = vmatpush2.bf16.msra.mxu0 0
        %958 = vmatprep.subr.bf16.mxu0 0
        %959 = vmatpush2.bf16.msra.mxu0 0
        %960 = vmatprep.mubr.bf16.mxu0 0
        %961 = vmatmul.mubr.bf16.gmra.mxu0 %v812
        %v962 = vpop.f32.mrf.mxu0
        %v963 = vadd.f32 %v841, %v962
        %v964 = vpop.f32.mrf.mxu0
        %v965 = vadd.f32 %v845, %v964
        %v966 = vpop.f32.mrf.mxu0
        %v967 = vadd.f32 %v841, %v966
        %v968 = vpop.f32.mrf.mxu0
        %v969 = vadd.f32 %v845, %v968
        %970 = vmatprep.mubr.bf16.mxu0 0
        %971 = vmatmul.mubr.bf16.gmra.mxu0 %v813
        %v972 = vpop.f32.mrf.mxu0
        %v973 = vadd.f32 %v841, %v972
        %v974 = vpop.f32.mrf.mxu0
        %v975 = vadd.f32 %v845, %v974
        %v976 = vpop.f32.mrf.mxu0
        %v977 = vadd.f32 %v841, %v976
        %v978 = vpop.f32.mrf.mxu0
        %v979 = vadd.f32 %v845, %v978
        %980 = vmatprep.mubr.bf16.mxu0 0
        %981 = vmatmul.mubr.bf16.gmra.mxu0 %v814
        %v982 = vpop.f32.mrf.mxu0
        %v983 = vadd.f32 %v841, %v982
        %v984 = vpop.f32.mrf.mxu0
        %v985 = vadd.f32 %v845, %v984
        %v986 = vpop.f32.mrf.mxu0
        %v987 = vadd.f32 %v841, %v986
        %v988 = vpop.f32.mrf.mxu0
        %v989 = vadd.f32 %v845, %v988
        %990 = vmatprep.mubr.bf16.mxu0 0
        %991 = vmatmul.mubr.bf16.gmra.mxu0 %v815
        %v992 = vpop.f32.mrf.mxu0
        %v993 = vadd.f32 %v841, %v992
        %v994 = vpop.f32.mrf.mxu0
        %v995 = vadd.f32 %v845, %v994
        %v996 = vpop.f32.mrf.mxu0
        %v997 = vadd.f32 %v841, %v996
        %v998 = vpop.f32.mrf.mxu0
        %v999 = vadd.f32 %v845, %v998
        %1000 = vmatprep.mubr.bf16.mxu0 0
        %1001 = vmatmul.mubr.bf16.gmra.mxu0 %v816
        %v1002 = vpop.f32.mrf.mxu0
        %v1003 = vadd.f32 %v841, %v1002
        %v1004 = vpop.f32.mrf.mxu0
        %v1005 = vadd.f32 %v845, %v1004
        %v1006 = vpop.f32.mrf.mxu0
        %v1007 = vadd.f32 %v841, %v1006
        %v1008 = vpop.f32.mrf.mxu0
        %v1009 = vadd.f32 %v845, %v1008
        %1010 = vmatprep.mubr.bf16.mxu0 0
        %1011 = vmatmul.mubr.bf16.gmra.mxu0 %v817
        %v1012 = vpop.f32.mrf.mxu0
        %v1013 = vadd.f32 %v841, %v1012
        %v1014 = vpop.f32.mrf.mxu0
        %v1015 = vadd.f32 %v845, %v1014
        %v1016 = vpop.f32.mrf.mxu0
        %v1017 = vadd.f32 %v841, %v1016
        %v1018 = vpop.f32.mrf.mxu0
        %v1019 = vadd.f32 %v845, %v1018
        %1020 = vmatprep.mubr.bf16.mxu0 0
        %1021 = vmatmul.mubr.bf16.gmra.mxu0 %v818
        %v1022 = vpop.f32.mrf.mxu0
        %v1023 = vadd.f32 %v841, %v1022
        %v1024 = vpop.f32.mrf.mxu0
        %v1025 = vadd.f32 %v845, %v1024
        %v1026 = vpop.f32.mrf.mxu0
        %v1027 = vadd.f32 %v841, %v1026
        %v1028 = vpop.f32.mrf.mxu0
        %v1029 = vadd.f32 %v845, %v1028
        %1030 = vmatprep.mubr.bf16.mxu0 0
        %1031 = vmatmul.mubr.bf16.gmra.mxu0 %v819
        %v1032 = vpop.f32.mrf.mxu0
        %v1033 = vadd.f32 %v841, %v1032
        %v1034 = vpop.f32.mrf.mxu0
        %v1035 = vadd.f32 %v845, %v1034
        %v1036 = vpop.f32.mrf.mxu0
        %v1037 = vadd.f32 %v841, %v1036
        %v1038 = vpop.f32.mrf.mxu0
        %v1039 = vadd.f32 %v845, %v1038
        %1040 = vdwg.mxu0
        %v1041 = vmax.f32 %v963, 0.0
        %v1042 = vmax.f32 %v965, 0.0
        %v1043 = vmax.f32 %v967, 0.0
        %v1044 = vmax.f32 %v969, 0.0
        %v1045 = vmax.f32 %v973, 0.0
        %v1046 = vmax.f32 %v975, 0.0
        %v1047 = vmax.f32 %v977, 0.0
        %v1048 = vmax.f32 %v979, 0.0
        %v1049 = vmax.f32 %v983, 0.0
        %v1050 = vmax.f32 %v985, 0.0
        %v1051 = vmax.f32 %v987, 0.0
        %v1052 = vmax.f32 %v989, 0.0
        %v1053 = vmax.f32 %v993, 0.0
        %v1054 = vmax.f32 %v995, 0.0
        %v1055 = vmax.f32 %v997, 0.0
        %v1056 = vmax.f32 %v999, 0.0
        %v1057 = vmax.f32 %v1003, 0.0
        %v1058 = vmax.f32 %v1005, 0.0
        %v1059 = vmax.f32 %v1007, 0.0
        %v1060 = vmax.f32 %v1009, 0.0
        %v1061 = vmax.f32 %v1013, 0.0
        %v1062 = vmax.f32 %v1015, 0.0
        %v1063 = vmax.f32 %v1017, 0.0
        %v1064 = vmax.f32 %v1019, 0.0
        %v1065 = vmax.f32 %v1023, 0.0
        %v1066 = vmax.f32 %v1025, 0.0
        %v1067 = vmax.f32 %v1027, 0.0
        %v1068 = vmax.f32 %v1029, 0.0
        %v1069 = vmax.f32 %v1033, 0.0
        %v1070 = vmax.f32 %v1035, 0.0
        %v1071 = vmax.f32 %v1037, 0.0
        %v1072 = vmax.f32 %v1039, 0.0
        %v1073 = vpack.c.bf16 %v1043, %v1041
        %v1074 = vpack.c.bf16 %v1044, %v1042
        %v1075 = vpack.c.bf16 %v1047, %v1045
        %v1076 = vpack.c.bf16 %v1048, %v1046
        %v1077 = vpack.c.bf16 %v1051, %v1049
        %v1078 = vpack.c.bf16 %v1052, %v1050
        %v1079 = vpack.c.bf16 %v1055, %v1053
        %v1080 = vpack.c.bf16 %v1056, %v1054
        %v1081 = vpack.c.bf16 %v1059, %v1057
        %v1082 = vpack.c.bf16 %v1060, %v1058
        %v1083 = vpack.c.bf16 %v1063, %v1061
        %v1084 = vpack.c.bf16 %v1064, %v1062
        %v1085 = vpack.c.bf16 %v1067, %v1065
        %v1086 = vpack.c.bf16 %v1068, %v1066
        %v1087 = vpack.c.bf16 %v1071, %v1069
        %v1088 = vpack.c.bf16 %v1072, %v1070
        %v1105 = vunpack.c.l.b16 %v595
        %v1106 = vunpack.c.l.b16 %v596
        %v1107 = vunpack.c.l.b16 %v597
        %v1108 = vunpack.c.l.b16 %v598
        %v1109 = vunpack.c.l.b16 %v599
        %v1110 = vunpack.c.l.b16 %v600
        %v1111 = vunpack.c.l.b16 %v601
        %v1112 = vunpack.c.l.b16 %v602
        %v1113 = vunpack.c.l.b16 %v603
        %v1114 = vunpack.c.l.b16 %v604
        %v1115 = vunpack.c.l.b16 %v605
        %v1116 = vunpack.c.l.b16 %v606
        %v1117 = vunpack.c.l.b16 %v607
        %v1118 = vunpack.c.l.b16 %v608
        %v1119 = vunpack.c.l.b16 %v609
        %v1120 = vunpack.c.l.b16 %v610
        %v1121 = vpack.c.b16 %v1106, %v1105
        %v1122 = vpack.c.b16 %v1108, %v1107
        %v1123 = vpack.c.b16 %v1110, %v1109
        %v1124 = vpack.c.b16 %v1112, %v1111
        %v1125 = vpack.c.b16 %v1114, %v1113
        %v1126 = vpack.c.b16 %v1116, %v1115
        %v1127 = vpack.c.b16 %v1118, %v1117
        %v1128 = vpack.c.b16 %v1120, %v1119
        %1137 = vmatprep.subr.bf16.mxu0 %v1088
        %1138 = vmatpush1.bf16.msra.mxu0 %v1087
        %1139 = vmatprep.subr.bf16.mxu0 %v1086
        %1140 = vmatpush1.bf16.msra.mxu0 %v1085
        %1141 = vmatprep.subr.bf16.mxu0 %v1084
        %1142 = vmatpush1.bf16.msra.mxu0 %v1083
        %1143 = vmatprep.subr.bf16.mxu0 %v1082
        %1144 = vmatpush1.bf16.msra.mxu0 %v1081
        %1145 = vmatprep.subr.bf16.mxu0 %v1080
        %1146 = vmatpush1.bf16.msra.mxu0 %v1079
        %1147 = vmatprep.subr.bf16.mxu0 %v1078
        %1148 = vmatpush1.bf16.msra.mxu0 %v1077
        %1149 = vmatprep.subr.bf16.mxu0 %v1076
        %1150 = vmatpush1.bf16.msra.mxu0 %v1075
        %1151 = vmatprep.subr.bf16.mxu0 %v1074
        %1152 = vmatpush1.bf16.msra.mxu0 %v1073
        %1153 = vmatprep.subr.bf16.mxu0 0
        %1154 = vmatpush2.bf16.msra.mxu0 0
        %1155 = vmatprep.subr.bf16.mxu0 0
        %1156 = vmatpush2.bf16.msra.mxu0 0
        %1157 = vmatprep.subr.bf16.mxu0 0
        %1158 = vmatpush2.bf16.msra.mxu0 0
        %1159 = vmatprep.subr.bf16.mxu0 0
        %1160 = vmatpush2.bf16.msra.mxu0 0
        %1161 = vmatprep.subr.bf16.mxu0 0
        %1162 = vmatpush2.bf16.msra.mxu0 0
        %1163 = vmatprep.subr.bf16.mxu0 0
        %1164 = vmatpush2.bf16.msra.mxu0 0
        %1165 = vmatprep.subr.bf16.mxu0 0
        %1166 = vmatpush2.bf16.msra.mxu0 0
        %1167 = vmatprep.subr.bf16.mxu0 0
        %1168 = vmatpush2.bf16.msra.mxu0 0
        %1169 = vmatprep.mubr.bf16.mxu0 0
        %1170 = vmatmul.mubr.bf16.gmra.mxu0 %v1121
        %v1171 = vpop.f32.mrf.mxu0
        %v1172 = vadd.f32 0.0, %v1171
        %v1173 = vpop.f32.mrf.mxu0
        %v1174 = vadd.f32 0.0, %v1173
        %v1175 = vpop.f32.mrf.mxu0
        %v1176 = vadd.f32 0.0, %v1175
        %v1177 = vpop.f32.mrf.mxu0
        %v1178 = vadd.f32 0.0, %v1177
        %1179 = vmatprep.mubr.bf16.mxu0 0
        %1180 = vmatmul.mubr.bf16.gmra.mxu0 %v1122
        %v1181 = vpop.f32.mrf.mxu0
        %v1182 = vadd.f32 0.0, %v1181
        %v1183 = vpop.f32.mrf.mxu0
        %v1184 = vadd.f32 0.0, %v1183
        %v1185 = vpop.f32.mrf.mxu0
        %v1186 = vadd.f32 0.0, %v1185
        %v1187 = vpop.f32.mrf.mxu0
        %v1188 = vadd.f32 0.0, %v1187
        %1189 = vmatprep.mubr.bf16.mxu0 0
        %1190 = vmatmul.mubr.bf16.gmra.mxu0 %v1123
        %v1191 = vpop.f32.mrf.mxu0
        %v1192 = vadd.f32 0.0, %v1191
        %v1193 = vpop.f32.mrf.mxu0
        %v1194 = vadd.f32 0.0, %v1193
        %v1195 = vpop.f32.mrf.mxu0
        %v1196 = vadd.f32 0.0, %v1195
        %v1197 = vpop.f32.mrf.mxu0
        %v1198 = vadd.f32 0.0, %v1197
        %1199 = vmatprep.mubr.bf16.mxu0 0
        %1200 = vmatmul.mubr.bf16.gmra.mxu0 %v1124
        %v1201 = vpop.f32.mrf.mxu0
        %v1202 = vadd.f32 0.0, %v1201
        %v1203 = vpop.f32.mrf.mxu0
        %v1204 = vadd.f32 0.0, %v1203
        %v1205 = vpop.f32.mrf.mxu0
        %v1206 = vadd.f32 0.0, %v1205
        %v1207 = vpop.f32.mrf.mxu0
        %v1208 = vadd.f32 0.0, %v1207
        %1209 = vmatprep.mubr.bf16.mxu0 0
        %1210 = vmatmul.mubr.bf16.gmra.mxu0 %v1125
        %v1211 = vpop.f32.mrf.mxu0
        %v1212 = vadd.f32 0.0, %v1211
        %v1213 = vpop.f32.mrf.mxu0
        %v1214 = vadd.f32 0.0, %v1213
        %v1215 = vpop.f32.mrf.mxu0
        %v1216 = vadd.f32 0.0, %v1215
        %v1217 = vpop.f32.mrf.mxu0
        %v1218 = vadd.f32 0.0, %v1217
        %1219 = vmatprep.mubr.bf16.mxu0 0
        %1220 = vmatmul.mubr.bf16.gmra.mxu0 %v1126
        %v1221 = vpop.f32.mrf.mxu0
        %v1222 = vadd.f32 0.0, %v1221
        %v1223 = vpop.f32.mrf.mxu0
        %v1224 = vadd.f32 0.0, %v1223
        %v1225 = vpop.f32.mrf.mxu0
        %v1226 = vadd.f32 0.0, %v1225
        %v1227 = vpop.f32.mrf.mxu0
        %v1228 = vadd.f32 0.0, %v1227
        %1229 = vmatprep.mubr.bf16.mxu0 0
        %1230 = vmatmul.mubr.bf16.gmra.mxu0 %v1127
        %v1231 = vpop.f32.mrf.mxu0
        %v1232 = vadd.f32 0.0, %v1231
        %v1233 = vpop.f32.mrf.mxu0
        %v1234 = vadd.f32 0.0, %v1233
        %v1235 = vpop.f32.mrf.mxu0
        %v1236 = vadd.f32 0.0, %v1235
        %v1237 = vpop.f32.mrf.mxu0
        %v1238 = vadd.f32 0.0, %v1237
        %1239 = vmatprep.mubr.bf16.mxu0 0
        %1240 = vmatmul.mubr.bf16.gmra.mxu0 %v1128
        %v1241 = vpop.f32.mrf.mxu0
        %v1242 = vadd.f32 0.0, %v1241
        %v1243 = vpop.f32.mrf.mxu0
        %v1244 = vadd.f32 0.0, %v1243
        %v1245 = vpop.f32.mrf.mxu0
        %v1246 = vadd.f32 0.0, %v1245
        %v1247 = vpop.f32.mrf.mxu0
        %v1248 = vadd.f32 0.0, %v1247
        %1249 = vdwg.mxu0
        %v1250 = vpack.c.bf16 %v1176, %v1172
        %v1251 = vpack.c.bf16 %v1178, %v1174
        %v1252 = vpack.c.bf16 %v1186, %v1182
        %v1253 = vpack.c.bf16 %v1188, %v1184
        %v1254 = vpack.c.bf16 %v1196, %v1192
        %v1255 = vpack.c.bf16 %v1198, %v1194
        %v1256 = vpack.c.bf16 %v1206, %v1202
        %v1257 = vpack.c.bf16 %v1208, %v1204
        %v1258 = vpack.c.bf16 %v1216, %v1212
        %v1259 = vpack.c.bf16 %v1218, %v1214
        %v1260 = vpack.c.bf16 %v1226, %v1222
        %v1261 = vpack.c.bf16 %v1228, %v1224
        %v1262 = vpack.c.bf16 %v1236, %v1232
        %v1263 = vpack.c.bf16 %v1238, %v1234
        %v1264 = vpack.c.bf16 %v1246, %v1242
        %v1265 = vpack.c.bf16 %v1248, %v1244
        %v1266 = vld [vmem:[#allocation6] sm:$0xff]
        %v1267 = vld [vmem:[#allocation6 + $0x8] sm:$0xff]
        %v1268 = vld [vmem:[#allocation6 + $0x10] sm:$0xff]
        %v1269 = vld [vmem:[#allocation6 + $0x18] sm:$0xff]
        %v1270 = vld [vmem:[#allocation6 + $0x20] sm:$0xff]
        %v1271 = vld [vmem:[#allocation6 + $0x28] sm:$0xff]
        %v1272 = vld [vmem:[#allocation6 + $0x30] sm:$0xff]
        %v1273 = vld [vmem:[#allocation6 + $0x38] sm:$0xff]
        %v1274 = vld [vmem:[#allocation6 + $0x40] sm:$0xff]
        %v1275 = vld [vmem:[#allocation6 + $0x48] sm:$0xff]
        %v1276 = vld [vmem:[#allocation6 + $0x50] sm:$0xff]
        %v1277 = vld [vmem:[#allocation6 + $0x58] sm:$0xff]
        %v1278 = vld [vmem:[#allocation6 + $0x60] sm:$0xff]
        %v1279 = vld [vmem:[#allocation6 + $0x68] sm:$0xff]
        %v1280 = vld [vmem:[#allocation6 + $0x70] sm:$0xff]
        %v1281 = vld [vmem:[#allocation6 + $0x78] sm:$0xff]
        %v1282 = vld [vmem:[#allocation6 + $0x80] sm:$0xff]
        %v1283 = vld [vmem:[#allocation6 + $0x88] sm:$0xff]
        %v1284 = vld [vmem:[#allocation6 + $0x90] sm:$0xff]
        %v1285 = vld [vmem:[#allocation6 + $0x98] sm:$0xff]
        %v1286 = vld [vmem:[#allocation6 + $0xa0] sm:$0xff]
        %v1287 = vld [vmem:[#allocation6 + $0xa8] sm:$0xff]
        %v1288 = vld [vmem:[#allocation6 + $0xb0] sm:$0xff]
        %v1289 = vld [vmem:[#allocation6 + $0xb8] sm:$0xff]
        %v1290 = vld [vmem:[#allocation6 + $0xc0] sm:$0xff]
        %v1291 = vld [vmem:[#allocation6 + $0xc8] sm:$0xff]
        %v1292 = vld [vmem:[#allocation6 + $0xd0] sm:$0xff]
        %v1293 = vld [vmem:[#allocation6 + $0xd8] sm:$0xff]
        %v1294 = vld [vmem:[#allocation6 + $0xe0] sm:$0xff]
        %v1295 = vld [vmem:[#allocation6 + $0xe8] sm:$0xff]
        %v1296 = vld [vmem:[#allocation6 + $0xf0] sm:$0xff]
        %v1297 = vld [vmem:[#allocation6 + $0xf8] sm:$0xff]
        %v1298 = vld [vmem:[%s8] sm:$0x3]
        %v1300 = vlaneseq
        %v1301 = vshrl.u32 %v1300, 7
        %v1302 = vsub.s32 0, %v1301
        %v1303 = vrot.slane %v1298, %v1302
        %v1304 = vlaneseq
        %v1305 = vshrl.u32 %v1304, 7
        %v1306 = vsub.s32 1, %v1305
        %v1307 = vrot.slane %v1298, %v1306
        %v1342 = vunpack.c.l.b16 %v1266
        %v1343 = vunpack.c.h.b16 %v1266
        %v1344 = vunpack.c.l.b16 %v1267
        %v1345 = vunpack.c.h.b16 %v1267
        %v1346 = vunpack.c.l.b16 %v1268
        %v1347 = vunpack.c.h.b16 %v1268
        %v1348 = vunpack.c.l.b16 %v1269
        %v1349 = vunpack.c.h.b16 %v1269
        %v1350 = vunpack.c.l.b16 %v1270
        %v1351 = vunpack.c.h.b16 %v1270
        %v1352 = vunpack.c.l.b16 %v1271
        %v1353 = vunpack.c.h.b16 %v1271
        %v1354 = vunpack.c.l.b16 %v1272
        %v1355 = vunpack.c.h.b16 %v1272
        %v1356 = vunpack.c.l.b16 %v1273
        %v1357 = vunpack.c.h.b16 %v1273
        %v1358 = vunpack.c.l.b16 %v1274
        %v1359 = vunpack.c.h.b16 %v1274
        %v1360 = vunpack.c.l.b16 %v1275
        %v1361 = vunpack.c.h.b16 %v1275
        %v1362 = vunpack.c.l.b16 %v1276
        %v1363 = vunpack.c.h.b16 %v1276
        %v1364 = vunpack.c.l.b16 %v1277
        %v1365 = vunpack.c.h.b16 %v1277
        %v1366 = vunpack.c.l.b16 %v1278
        %v1367 = vunpack.c.h.b16 %v1278
        %v1368 = vunpack.c.l.b16 %v1279
        %v1369 = vunpack.c.h.b16 %v1279
        %v1370 = vunpack.c.l.b16 %v1280
        %v1371 = vunpack.c.h.b16 %v1280
        %v1372 = vunpack.c.l.b16 %v1281
        %v1373 = vunpack.c.h.b16 %v1281
        %v1374 = vunpack.c.l.b16 %v1282
        %v1375 = vunpack.c.h.b16 %v1282
        %v1376 = vunpack.c.l.b16 %v1283
        %v1377 = vunpack.c.h.b16 %v1283
        %v1378 = vunpack.c.l.b16 %v1284
        %v1379 = vunpack.c.h.b16 %v1284
        %v1380 = vunpack.c.l.b16 %v1285
        %v1381 = vunpack.c.h.b16 %v1285
        %v1382 = vunpack.c.l.b16 %v1286
        %v1383 = vunpack.c.h.b16 %v1286
        %v1384 = vunpack.c.l.b16 %v1287
        %v1385 = vunpack.c.h.b16 %v1287
        %v1386 = vunpack.c.l.b16 %v1288
        %v1387 = vunpack.c.h.b16 %v1288
        %v1388 = vunpack.c.l.b16 %v1289
        %v1389 = vunpack.c.h.b16 %v1289
        %v1390 = vunpack.c.l.b16 %v1290
        %v1391 = vunpack.c.h.b16 %v1290
        %v1392 = vunpack.c.l.b16 %v1291
        %v1393 = vunpack.c.h.b16 %v1291
        %v1394 = vunpack.c.l.b16 %v1292
        %v1395 = vunpack.c.h.b16 %v1292
        %v1396 = vunpack.c.l.b16 %v1293
        %v1397 = vunpack.c.h.b16 %v1293
        %v1398 = vunpack.c.l.b16 %v1294
        %v1399 = vunpack.c.h.b16 %v1294
        %v1400 = vunpack.c.l.b16 %v1295
        %v1401 = vunpack.c.h.b16 %v1295
        %v1402 = vunpack.c.l.b16 %v1296
        %v1403 = vunpack.c.h.b16 %v1296
        %v1404 = vunpack.c.l.b16 %v1297
        %v1405 = vunpack.c.h.b16 %v1297
        %v1406 = vpack.c.b16 %v1344, %v1342
        %v1407 = vpack.c.b16 %v1345, %v1343
        %v1408 = vpack.c.b16 %v1348, %v1346
        %v1409 = vpack.c.b16 %v1349, %v1347
        %v1410 = vpack.c.b16 %v1352, %v1350
        %v1411 = vpack.c.b16 %v1353, %v1351
        %v1412 = vpack.c.b16 %v1356, %v1354
        %v1413 = vpack.c.b16 %v1357, %v1355
        %v1414 = vpack.c.b16 %v1360, %v1358
        %v1415 = vpack.c.b16 %v1361, %v1359
        %v1416 = vpack.c.b16 %v1364, %v1362
        %v1417 = vpack.c.b16 %v1365, %v1363
        %v1418 = vpack.c.b16 %v1368, %v1366
        %v1419 = vpack.c.b16 %v1369, %v1367
        %v1420 = vpack.c.b16 %v1372, %v1370
        %v1421 = vpack.c.b16 %v1373, %v1371
        %v1422 = vpack.c.b16 %v1376, %v1374
        %v1423 = vpack.c.b16 %v1377, %v1375
        %v1424 = vpack.c.b16 %v1380, %v1378
        %v1425 = vpack.c.b16 %v1381, %v1379
        %v1426 = vpack.c.b16 %v1384, %v1382
        %v1427 = vpack.c.b16 %v1385, %v1383
        %v1428 = vpack.c.b16 %v1388, %v1386
        %v1429 = vpack.c.b16 %v1389, %v1387
        %v1430 = vpack.c.b16 %v1392, %v1390
        %v1431 = vpack.c.b16 %v1393, %v1391
        %v1432 = vpack.c.b16 %v1396, %v1394
        %v1433 = vpack.c.b16 %v1397, %v1395
        %v1434 = vpack.c.b16 %v1400, %v1398
        %v1435 = vpack.c.b16 %v1401, %v1399
        %v1436 = vpack.c.b16 %v1404, %v1402
        %v1437 = vpack.c.b16 %v1405, %v1403
        %1470 = vmatprep.subr.bf16.mxu0 %v1421
        %1471 = vmatpush1.bf16.msra.mxu0 %v1420
        %1472 = vmatprep.subr.bf16.mxu0 %v1419
        %1473 = vmatpush1.bf16.msra.mxu0 %v1418
        %1474 = vmatprep.subr.bf16.mxu0 %v1417
        %1475 = vmatpush1.bf16.msra.mxu0 %v1416
        %1476 = vmatprep.subr.bf16.mxu0 %v1415
        %1477 = vmatpush1.bf16.msra.mxu0 %v1414
        %1478 = vmatprep.subr.bf16.mxu0 %v1413
        %1479 = vmatpush1.bf16.msra.mxu0 %v1412
        %1480 = vmatprep.subr.bf16.mxu0 %v1411
        %1481 = vmatpush1.bf16.msra.mxu0 %v1410
        %1482 = vmatprep.subr.bf16.mxu0 %v1409
        %1483 = vmatpush1.bf16.msra.mxu0 %v1408
        %1484 = vmatprep.subr.bf16.mxu0 %v1407
        %1485 = vmatpush1.bf16.msra.mxu0 %v1406
        %1486 = vmatprep.subr.bf16.mxu0 %v1437
        %1487 = vmatpush2.bf16.msra.mxu0 %v1436
        %1488 = vmatprep.subr.bf16.mxu0 %v1435
        %1489 = vmatpush2.bf16.msra.mxu0 %v1434
        %1490 = vmatprep.subr.bf16.mxu0 %v1433
        %1491 = vmatpush2.bf16.msra.mxu0 %v1432
        %1492 = vmatprep.subr.bf16.mxu0 %v1431
        %1493 = vmatpush2.bf16.msra.mxu0 %v1430
        %1494 = vmatprep.subr.bf16.mxu0 %v1429
        %1495 = vmatpush2.bf16.msra.mxu0 %v1428
        %1496 = vmatprep.subr.bf16.mxu0 %v1427
        %1497 = vmatpush2.bf16.msra.mxu0 %v1426
        %1498 = vmatprep.subr.bf16.mxu0 %v1425
        %1499 = vmatpush2.bf16.msra.mxu0 %v1424
        %1500 = vmatprep.subr.bf16.mxu0 %v1423
        %1501 = vmatpush2.bf16.msra.mxu0 %v1422
        %1502 = vmatprep.mubr.bf16.mxu0 %v1251
        %1503 = vmatmul.mubr.bf16.gmra.mxu0 %v1250
        %v1504 = vpop.f32.mrf.mxu0
        %v1505 = vadd.f32 %v1303, %v1504
        %v1506 = vpop.f32.mrf.mxu0
        %v1507 = vadd.f32 %v1307, %v1506
        %v1508 = vpop.f32.mrf.mxu0
        %v1509 = vadd.f32 %v1303, %v1508
        %v1510 = vpop.f32.mrf.mxu0
        %v1511 = vadd.f32 %v1307, %v1510
        %1512 = vmatprep.mubr.bf16.mxu0 %v1253
        %1513 = vmatmul.mubr.bf16.gmra.mxu0 %v1252
        %v1514 = vpop.f32.mrf.mxu0
        %v1515 = vadd.f32 %v1303, %v1514
        %v1516 = vpop.f32.mrf.mxu0
        %v1517 = vadd.f32 %v1307, %v1516
        %v1518 = vpop.f32.mrf.mxu0
        %v1519 = vadd.f32 %v1303, %v1518
        %v1520 = vpop.f32.mrf.mxu0
        %v1521 = vadd.f32 %v1307, %v1520
        %1522 = vmatprep.mubr.bf16.mxu0 %v1255
        %1523 = vmatmul.mubr.bf16.gmra.mxu0 %v1254
        %v1524 = vpop.f32.mrf.mxu0
        %v1525 = vadd.f32 %v1303, %v1524
        %v1526 = vpop.f32.mrf.mxu0
        %v1527 = vadd.f32 %v1307, %v1526
        %v1528 = vpop.f32.mrf.mxu0
        %v1529 = vadd.f32 %v1303, %v1528
        %v1530 = vpop.f32.mrf.mxu0
        %v1531 = vadd.f32 %v1307, %v1530
        %1532 = vmatprep.mubr.bf16.mxu0 %v1257
        %1533 = vmatmul.mubr.bf16.gmra.mxu0 %v1256
        %v1534 = vpop.f32.mrf.mxu0
        %v1535 = vadd.f32 %v1303, %v1534
        %v1536 = vpop.f32.mrf.mxu0
        %v1537 = vadd.f32 %v1307, %v1536
        %v1538 = vpop.f32.mrf.mxu0
        %v1539 = vadd.f32 %v1303, %v1538
        %v1540 = vpop.f32.mrf.mxu0
        %v1541 = vadd.f32 %v1307, %v1540
        %1542 = vmatprep.mubr.bf16.mxu0 %v1259
        %1543 = vmatmul.mubr.bf16.gmra.mxu0 %v1258
        %v1544 = vpop.f32.mrf.mxu0
        %v1545 = vadd.f32 %v1303, %v1544
        %v1546 = vpop.f32.mrf.mxu0
        %v1547 = vadd.f32 %v1307, %v1546
        %v1548 = vpop.f32.mrf.mxu0
        %v1549 = vadd.f32 %v1303, %v1548
        %v1550 = vpop.f32.mrf.mxu0
        %v1551 = vadd.f32 %v1307, %v1550
        %1552 = vmatprep.mubr.bf16.mxu0 %v1261
        %1553 = vmatmul.mubr.bf16.gmra.mxu0 %v1260
        %v1554 = vpop.f32.mrf.mxu0
        %v1555 = vadd.f32 %v1303, %v1554
        %v1556 = vpop.f32.mrf.mxu0
        %v1557 = vadd.f32 %v1307, %v1556
        %v1558 = vpop.f32.mrf.mxu0
        %v1559 = vadd.f32 %v1303, %v1558
        %v1560 = vpop.f32.mrf.mxu0
        %v1561 = vadd.f32 %v1307, %v1560
        %1562 = vmatprep.mubr.bf16.mxu0 %v1263
        %1563 = vmatmul.mubr.bf16.gmra.mxu0 %v1262
        %v1564 = vpop.f32.mrf.mxu0
        %v1565 = vadd.f32 %v1303, %v1564
        %v1566 = vpop.f32.mrf.mxu0
        %v1567 = vadd.f32 %v1307, %v1566
        %v1568 = vpop.f32.mrf.mxu0
        %v1569 = vadd.f32 %v1303, %v1568
        %v1570 = vpop.f32.mrf.mxu0
        %v1571 = vadd.f32 %v1307, %v1570
        %1572 = vmatprep.mubr.bf16.mxu0 %v1265
        %1573 = vmatmul.mubr.bf16.gmra.mxu0 %v1264
        %v1574 = vpop.f32.mrf.mxu0
        %v1575 = vadd.f32 %v1303, %v1574
        %v1576 = vpop.f32.mrf.mxu0
        %v1577 = vadd.f32 %v1307, %v1576
        %v1578 = vpop.f32.mrf.mxu0
        %v1579 = vadd.f32 %v1303, %v1578
        %v1580 = vpop.f32.mrf.mxu0
        %v1581 = vadd.f32 %v1307, %v1580
        %1582 = vdwg.mxu0
        %v1583 = vmax.f32 %v1505, 0.0
        %v1584 = vmax.f32 %v1507, 0.0
        %v1585 = vmax.f32 %v1509, 0.0
        %v1586 = vmax.f32 %v1511, 0.0
        %v1587 = vmax.f32 %v1515, 0.0
        %v1588 = vmax.f32 %v1517, 0.0
        %v1589 = vmax.f32 %v1519, 0.0
        %v1590 = vmax.f32 %v1521, 0.0
        %v1591 = vmax.f32 %v1525, 0.0
        %v1592 = vmax.f32 %v1527, 0.0
        %v1593 = vmax.f32 %v1529, 0.0
        %v1594 = vmax.f32 %v1531, 0.0
        %v1595 = vmax.f32 %v1535, 0.0
        %v1596 = vmax.f32 %v1537, 0.0
        %v1597 = vmax.f32 %v1539, 0.0
        %v1598 = vmax.f32 %v1541, 0.0
        %v1599 = vmax.f32 %v1545, 0.0
        %v1600 = vmax.f32 %v1547, 0.0
        %v1601 = vmax.f32 %v1549, 0.0
        %v1602 = vmax.f32 %v1551, 0.0
        %v1603 = vmax.f32 %v1555, 0.0
        %v1604 = vmax.f32 %v1557, 0.0
        %v1605 = vmax.f32 %v1559, 0.0
        %v1606 = vmax.f32 %v1561, 0.0
        %v1607 = vmax.f32 %v1565, 0.0
        %v1608 = vmax.f32 %v1567, 0.0
        %v1609 = vmax.f32 %v1569, 0.0
        %v1610 = vmax.f32 %v1571, 0.0
        %v1611 = vmax.f32 %v1575, 0.0
        %v1612 = vmax.f32 %v1577, 0.0
        %v1613 = vmax.f32 %v1579, 0.0
        %v1614 = vmax.f32 %v1581, 0.0
        %v1615 = vpack.c.bf16 %v1585, %v1583
        %v1616 = vpack.c.bf16 %v1586, %v1584
        %v1617 = vpack.c.bf16 %v1589, %v1587
        %v1618 = vpack.c.bf16 %v1590, %v1588
        %v1619 = vpack.c.bf16 %v1593, %v1591
        %v1620 = vpack.c.bf16 %v1594, %v1592
        %v1621 = vpack.c.bf16 %v1597, %v1595
        %v1622 = vpack.c.bf16 %v1598, %v1596
        %v1623 = vpack.c.bf16 %v1601, %v1599
        %v1624 = vpack.c.bf16 %v1602, %v1600
        %v1625 = vpack.c.bf16 %v1605, %v1603
        %v1626 = vpack.c.bf16 %v1606, %v1604
        %v1627 = vpack.c.bf16 %v1609, %v1607
        %v1628 = vpack.c.bf16 %v1610, %v1608
        %v1629 = vpack.c.bf16 %v1613, %v1611
        %v1630 = vpack.c.bf16 %v1614, %v1612
        %1631 = vmatprep.subr.bf16.mxu0 %v1630
        %1632 = vmatpush1.bf16.msra.mxu0 %v1629
        %1633 = vmatprep.subr.bf16.mxu0 %v1628
        %1634 = vmatpush1.bf16.msra.mxu0 %v1627
        %1635 = vmatprep.subr.bf16.mxu0 %v1626
        %1636 = vmatpush1.bf16.msra.mxu0 %v1625
        %1637 = vmatprep.subr.bf16.mxu0 %v1624
        %1638 = vmatpush1.bf16.msra.mxu0 %v1623
        %1639 = vmatprep.subr.bf16.mxu0 %v1622
        %1640 = vmatpush1.bf16.msra.mxu0 %v1621
        %1641 = vmatprep.subr.bf16.mxu0 %v1620
        %1642 = vmatpush1.bf16.msra.mxu0 %v1619
        %1643 = vmatprep.subr.bf16.mxu0 %v1618
        %1644 = vmatpush1.bf16.msra.mxu0 %v1617
        %1645 = vmatprep.subr.bf16.mxu0 %v1616
        %1646 = vmatpush1.bf16.msra.mxu0 %v1615
        %1647 = vmatprep.subr.bf16.mxu0 0
        %1648 = vmatpush2.bf16.msra.mxu0 0
        %1649 = vmatprep.subr.bf16.mxu0 0
        %1650 = vmatpush2.bf16.msra.mxu0 0
        %1651 = vmatprep.subr.bf16.mxu0 0
        %1652 = vmatpush2.bf16.msra.mxu0 0
        %1653 = vmatprep.subr.bf16.mxu0 0
        %1654 = vmatpush2.bf16.msra.mxu0 0
        %1655 = vmatprep.subr.bf16.mxu0 0
        %1656 = vmatpush2.bf16.msra.mxu0 0
        %1657 = vmatprep.subr.bf16.mxu0 0
        %1658 = vmatpush2.bf16.msra.mxu0 0
        %1659 = vmatprep.subr.bf16.mxu0 0
        %1660 = vmatpush2.bf16.msra.mxu0 0
        %1661 = vmatprep.subr.bf16.mxu0 0
        %1662 = vmatpush2.bf16.msra.mxu0 0
        %1663 = vmatprep.mubr.bf16.mxu0 0
        %1664 = vmatmul.mubr.bf16.gmra.mxu0 %v1121
        %v1665 = vpop.f32.mrf.mxu0
        %v1666 = vadd.f32 0.0, %v1665
        %v1667 = vpop.f32.mrf.mxu0
        %v1668 = vadd.f32 0.0, %v1667
        %v1669 = vpop.f32.mrf.mxu0
        %v1670 = vadd.f32 0.0, %v1669
        %v1671 = vpop.f32.mrf.mxu0
        %v1672 = vadd.f32 0.0, %v1671
        %1673 = vmatprep.mubr.bf16.mxu0 0
        %1674 = vmatmul.mubr.bf16.gmra.mxu0 %v1122
        %v1675 = vpop.f32.mrf.mxu0
        %v1676 = vadd.f32 0.0, %v1675
        %v1677 = vpop.f32.mrf.mxu0
        %v1678 = vadd.f32 0.0, %v1677
        %v1679 = vpop.f32.mrf.mxu0
        %v1680 = vadd.f32 0.0, %v1679
        %v1681 = vpop.f32.mrf.mxu0
        %v1682 = vadd.f32 0.0, %v1681
        %1683 = vmatprep.mubr.bf16.mxu0 0
        %1684 = vmatmul.mubr.bf16.gmra.mxu0 %v1123
        %v1685 = vpop.f32.mrf.mxu0
        %v1686 = vadd.f32 0.0, %v1685
        %v1687 = vpop.f32.mrf.mxu0
        %v1688 = vadd.f32 0.0, %v1687
        %v1689 = vpop.f32.mrf.mxu0
        %v1690 = vadd.f32 0.0, %v1689
        %v1691 = vpop.f32.mrf.mxu0
        %v1692 = vadd.f32 0.0, %v1691
        %1693 = vmatprep.mubr.bf16.mxu0 0
        %1694 = vmatmul.mubr.bf16.gmra.mxu0 %v1124
        %v1695 = vpop.f32.mrf.mxu0
        %v1696 = vadd.f32 0.0, %v1695
        %v1697 = vpop.f32.mrf.mxu0
        %v1698 = vadd.f32 0.0, %v1697
        %v1699 = vpop.f32.mrf.mxu0
        %v1700 = vadd.f32 0.0, %v1699
        %v1701 = vpop.f32.mrf.mxu0
        %v1702 = vadd.f32 0.0, %v1701
        %1703 = vmatprep.mubr.bf16.mxu0 0
        %1704 = vmatmul.mubr.bf16.gmra.mxu0 %v1125
        %v1705 = vpop.f32.mrf.mxu0
        %v1706 = vadd.f32 0.0, %v1705
        %v1707 = vpop.f32.mrf.mxu0
        %v1708 = vadd.f32 0.0, %v1707
        %v1709 = vpop.f32.mrf.mxu0
        %v1710 = vadd.f32 0.0, %v1709
        %v1711 = vpop.f32.mrf.mxu0
        %v1712 = vadd.f32 0.0, %v1711
        %1713 = vmatprep.mubr.bf16.mxu0 0
        %1714 = vmatmul.mubr.bf16.gmra.mxu0 %v1126
        %v1715 = vpop.f32.mrf.mxu0
        %v1716 = vadd.f32 0.0, %v1715
        %v1717 = vpop.f32.mrf.mxu0
        %v1718 = vadd.f32 0.0, %v1717
        %v1719 = vpop.f32.mrf.mxu0
        %v1720 = vadd.f32 0.0, %v1719
        %v1721 = vpop.f32.mrf.mxu0
        %v1722 = vadd.f32 0.0, %v1721
        %1723 = vmatprep.mubr.bf16.mxu0 0
        %1724 = vmatmul.mubr.bf16.gmra.mxu0 %v1127
        %v1725 = vpop.f32.mrf.mxu0
        %v1726 = vadd.f32 0.0, %v1725
        %v1727 = vpop.f32.mrf.mxu0
        %v1728 = vadd.f32 0.0, %v1727
        %v1729 = vpop.f32.mrf.mxu0
        %v1730 = vadd.f32 0.0, %v1729
        %v1731 = vpop.f32.mrf.mxu0
        %v1732 = vadd.f32 0.0, %v1731
        %1733 = vmatprep.mubr.bf16.mxu0 0
        %1734 = vmatmul.mubr.bf16.gmra.mxu0 %v1128
        %v1735 = vpop.f32.mrf.mxu0
        %v1736 = vadd.f32 0.0, %v1735
        %v1737 = vpop.f32.mrf.mxu0
        %v1738 = vadd.f32 0.0, %v1737
        %v1739 = vpop.f32.mrf.mxu0
        %v1740 = vadd.f32 0.0, %v1739
        %v1741 = vpop.f32.mrf.mxu0
        %v1742 = vadd.f32 0.0, %v1741
        %1743 = vdwg.mxu0
        %v1744 = vpack.c.bf16 %v1670, %v1666
        %v1745 = vpack.c.bf16 %v1672, %v1668
        %v1746 = vpack.c.bf16 %v1680, %v1676
        %v1747 = vpack.c.bf16 %v1682, %v1678
        %v1748 = vpack.c.bf16 %v1690, %v1686
        %v1749 = vpack.c.bf16 %v1692, %v1688
        %v1750 = vpack.c.bf16 %v1700, %v1696
        %v1751 = vpack.c.bf16 %v1702, %v1698
        %v1752 = vpack.c.bf16 %v1710, %v1706
        %v1753 = vpack.c.bf16 %v1712, %v1708
        %v1754 = vpack.c.bf16 %v1720, %v1716
        %v1755 = vpack.c.bf16 %v1722, %v1718
        %v1756 = vpack.c.bf16 %v1730, %v1726
        %v1757 = vpack.c.bf16 %v1732, %v1728
        %v1758 = vpack.c.bf16 %v1740, %v1736
        %v1759 = vpack.c.bf16 %v1742, %v1738
        %v1760 = vld [vmem:[#allocation8] sm:$0xff]
        %v1761 = vld [vmem:[#allocation8 + $0x8] sm:$0xff]
        %v1762 = vld [vmem:[#allocation8 + $0x10] sm:$0xff]
        %v1763 = vld [vmem:[#allocation8 + $0x18] sm:$0xff]
        %v1764 = vld [vmem:[#allocation8 + $0x20] sm:$0xff]
        %v1765 = vld [vmem:[#allocation8 + $0x28] sm:$0xff]
        %v1766 = vld [vmem:[#allocation8 + $0x30] sm:$0xff]
        %v1767 = vld [vmem:[#allocation8 + $0x38] sm:$0xff]
        %v1768 = vld [vmem:[#allocation8 + $0x40] sm:$0xff]
        %v1769 = vld [vmem:[#allocation8 + $0x48] sm:$0xff]
        %v1770 = vld [vmem:[#allocation8 + $0x50] sm:$0xff]
        %v1771 = vld [vmem:[#allocation8 + $0x58] sm:$0xff]
        %v1772 = vld [vmem:[#allocation8 + $0x60] sm:$0xff]
        %v1773 = vld [vmem:[#allocation8 + $0x68] sm:$0xff]
        %v1774 = vld [vmem:[#allocation8 + $0x70] sm:$0xff]
        %v1775 = vld [vmem:[#allocation8 + $0x78] sm:$0xff]
        %v1776 = vld [vmem:[#allocation8 + $0x80] sm:$0xff]
        %v1777 = vld [vmem:[#allocation8 + $0x88] sm:$0xff]
        %v1778 = vld [vmem:[#allocation8 + $0x90] sm:$0xff]
        %v1779 = vld [vmem:[#allocation8 + $0x98] sm:$0xff]
        %v1780 = vld [vmem:[#allocation8 + $0xa0] sm:$0xff]
        %v1781 = vld [vmem:[#allocation8 + $0xa8] sm:$0xff]
        %v1782 = vld [vmem:[#allocation8 + $0xb0] sm:$0xff]
        %v1783 = vld [vmem:[#allocation8 + $0xb8] sm:$0xff]
        %v1784 = vld [vmem:[#allocation8 + $0xc0] sm:$0xff]
        %v1785 = vld [vmem:[#allocation8 + $0xc8] sm:$0xff]
        %v1786 = vld [vmem:[#allocation8 + $0xd0] sm:$0xff]
        %v1787 = vld [vmem:[#allocation8 + $0xd8] sm:$0xff]
        %v1788 = vld [vmem:[#allocation8 + $0xe0] sm:$0xff]
        %v1789 = vld [vmem:[#allocation8 + $0xe8] sm:$0xff]
        %v1790 = vld [vmem:[#allocation8 + $0xf0] sm:$0xff]
        %v1791 = vld [vmem:[#allocation8 + $0xf8] sm:$0xff]
        %v1792 = vld [vmem:[%s10] sm:$0x3]
        %v1794 = vlaneseq
        %v1795 = vshrl.u32 %v1794, 7
        %v1796 = vsub.s32 0, %v1795
        %v1797 = vrot.slane %v1792, %v1796
        %v1798 = vlaneseq
        %v1799 = vshrl.u32 %v1798, 7
        %v1800 = vsub.s32 1, %v1799
        %v1801 = vrot.slane %v1792, %v1800
        %v1836 = vunpack.c.l.b16 %v1760
        %v1837 = vunpack.c.h.b16 %v1760
        %v1838 = vunpack.c.l.b16 %v1761
        %v1839 = vunpack.c.h.b16 %v1761
        %v1840 = vunpack.c.l.b16 %v1762
        %v1841 = vunpack.c.h.b16 %v1762
        %v1842 = vunpack.c.l.b16 %v1763
        %v1843 = vunpack.c.h.b16 %v1763
        %v1844 = vunpack.c.l.b16 %v1764
        %v1845 = vunpack.c.h.b16 %v1764
        %v1846 = vunpack.c.l.b16 %v1765
        %v1847 = vunpack.c.h.b16 %v1765
        %v1848 = vunpack.c.l.b16 %v1766
        %v1849 = vunpack.c.h.b16 %v1766
        %v1850 = vunpack.c.l.b16 %v1767
        %v1851 = vunpack.c.h.b16 %v1767
        %v1852 = vunpack.c.l.b16 %v1768
        %v1853 = vunpack.c.h.b16 %v1768
        %v1854 = vunpack.c.l.b16 %v1769
        %v1855 = vunpack.c.h.b16 %v1769
        %v1856 = vunpack.c.l.b16 %v1770
        %v1857 = vunpack.c.h.b16 %v1770
        %v1858 = vunpack.c.l.b16 %v1771
        %v1859 = vunpack.c.h.b16 %v1771
        %v1860 = vunpack.c.l.b16 %v1772
        %v1861 = vunpack.c.h.b16 %v1772
        %v1862 = vunpack.c.l.b16 %v1773
        %v1863 = vunpack.c.h.b16 %v1773
        %v1864 = vunpack.c.l.b16 %v1774
        %v1865 = vunpack.c.h.b16 %v1774
        %v1866 = vunpack.c.l.b16 %v1775
        %v1867 = vunpack.c.h.b16 %v1775
        %v1868 = vunpack.c.l.b16 %v1776
        %v1869 = vunpack.c.h.b16 %v1776
        %v1870 = vunpack.c.l.b16 %v1777
        %v1871 = vunpack.c.h.b16 %v1777
        %v1872 = vunpack.c.l.b16 %v1778
        %v1873 = vunpack.c.h.b16 %v1778
        %v1874 = vunpack.c.l.b16 %v1779
        %v1875 = vunpack.c.h.b16 %v1779
        %v1876 = vunpack.c.l.b16 %v1780
        %v1877 = vunpack.c.h.b16 %v1780
        %v1878 = vunpack.c.l.b16 %v1781
        %v1879 = vunpack.c.h.b16 %v1781
        %v1880 = vunpack.c.l.b16 %v1782
        %v1881 = vunpack.c.h.b16 %v1782
        %v1882 = vunpack.c.l.b16 %v1783
        %v1883 = vunpack.c.h.b16 %v1783
        %v1884 = vunpack.c.l.b16 %v1784
        %v1885 = vunpack.c.h.b16 %v1784
        %v1886 = vunpack.c.l.b16 %v1785
        %v1887 = vunpack.c.h.b16 %v1785
        %v1888 = vunpack.c.l.b16 %v1786
        %v1889 = vunpack.c.h.b16 %v1786
        %v1890 = vunpack.c.l.b16 %v1787
        %v1891 = vunpack.c.h.b16 %v1787
        %v1892 = vunpack.c.l.b16 %v1788
        %v1893 = vunpack.c.h.b16 %v1788
        %v1894 = vunpack.c.l.b16 %v1789
        %v1895 = vunpack.c.h.b16 %v1789
        %v1896 = vunpack.c.l.b16 %v1790
        %v1897 = vunpack.c.h.b16 %v1790
        %v1898 = vunpack.c.l.b16 %v1791
        %v1899 = vunpack.c.h.b16 %v1791
        %v1900 = vpack.c.b16 %v1838, %v1836
        %v1901 = vpack.c.b16 %v1839, %v1837
        %v1902 = vpack.c.b16 %v1842, %v1840
        %v1903 = vpack.c.b16 %v1843, %v1841
        %v1904 = vpack.c.b16 %v1846, %v1844
        %v1905 = vpack.c.b16 %v1847, %v1845
        %v1906 = vpack.c.b16 %v1850, %v1848
        %v1907 = vpack.c.b16 %v1851, %v1849
        %v1908 = vpack.c.b16 %v1854, %v1852
        %v1909 = vpack.c.b16 %v1855, %v1853
        %v1910 = vpack.c.b16 %v1858, %v1856
        %v1911 = vpack.c.b16 %v1859, %v1857
        %v1912 = vpack.c.b16 %v1862, %v1860
        %v1913 = vpack.c.b16 %v1863, %v1861
        %v1914 = vpack.c.b16 %v1866, %v1864
        %v1915 = vpack.c.b16 %v1867, %v1865
        %v1916 = vpack.c.b16 %v1870, %v1868
        %v1917 = vpack.c.b16 %v1871, %v1869
        %v1918 = vpack.c.b16 %v1874, %v1872
        %v1919 = vpack.c.b16 %v1875, %v1873
        %v1920 = vpack.c.b16 %v1878, %v1876
        %v1921 = vpack.c.b16 %v1879, %v1877
        %v1922 = vpack.c.b16 %v1882, %v1880
        %v1923 = vpack.c.b16 %v1883, %v1881
        %v1924 = vpack.c.b16 %v1886, %v1884
        %v1925 = vpack.c.b16 %v1887, %v1885
        %v1926 = vpack.c.b16 %v1890, %v1888
        %v1927 = vpack.c.b16 %v1891, %v1889
        %v1928 = vpack.c.b16 %v1894, %v1892
        %v1929 = vpack.c.b16 %v1895, %v1893
        %v1930 = vpack.c.b16 %v1898, %v1896
        %v1931 = vpack.c.b16 %v1899, %v1897
        %1964 = vmatprep.subr.bf16.mxu0 %v1915
        %1965 = vmatpush1.bf16.msra.mxu0 %v1914
        %1966 = vmatprep.subr.bf16.mxu0 %v1913
        %1967 = vmatpush1.bf16.msra.mxu0 %v1912
        %1968 = vmatprep.subr.bf16.mxu0 %v1911
        %1969 = vmatpush1.bf16.msra.mxu0 %v1910
        %1970 = vmatprep.subr.bf16.mxu0 %v1909
        %1971 = vmatpush1.bf16.msra.mxu0 %v1908
        %1972 = vmatprep.subr.bf16.mxu0 %v1907
        %1973 = vmatpush1.bf16.msra.mxu0 %v1906
        %1974 = vmatprep.subr.bf16.mxu0 %v1905
        %1975 = vmatpush1.bf16.msra.mxu0 %v1904
        %1976 = vmatprep.subr.bf16.mxu0 %v1903
        %1977 = vmatpush1.bf16.msra.mxu0 %v1902
        %1978 = vmatprep.subr.bf16.mxu0 %v1901
        %1979 = vmatpush1.bf16.msra.mxu0 %v1900
        %1980 = vmatprep.subr.bf16.mxu0 %v1931
        %1981 = vmatpush2.bf16.msra.mxu0 %v1930
        %1982 = vmatprep.subr.bf16.mxu0 %v1929
        %1983 = vmatpush2.bf16.msra.mxu0 %v1928
        %1984 = vmatprep.subr.bf16.mxu0 %v1927
        %1985 = vmatpush2.bf16.msra.mxu0 %v1926
        %1986 = vmatprep.subr.bf16.mxu0 %v1925
        %1987 = vmatpush2.bf16.msra.mxu0 %v1924
        %1988 = vmatprep.subr.bf16.mxu0 %v1923
        %1989 = vmatpush2.bf16.msra.mxu0 %v1922
        %1990 = vmatprep.subr.bf16.mxu0 %v1921
        %1991 = vmatpush2.bf16.msra.mxu0 %v1920
        %1992 = vmatprep.subr.bf16.mxu0 %v1919
        %1993 = vmatpush2.bf16.msra.mxu0 %v1918
        %1994 = vmatprep.subr.bf16.mxu0 %v1917
        %1995 = vmatpush2.bf16.msra.mxu0 %v1916
        %1996 = vmatprep.mubr.bf16.mxu0 %v1745
        %1997 = vmatmul.mubr.bf16.gmra.mxu0 %v1744
        %v1998 = vpop.f32.mrf.mxu0
        %v1999 = vadd.f32 %v1797, %v1998
        %v2000 = vpop.f32.mrf.mxu0
        %v2001 = vadd.f32 %v1801, %v2000
        %v2002 = vpop.f32.mrf.mxu0
        %v2003 = vadd.f32 %v1797, %v2002
        %v2004 = vpop.f32.mrf.mxu0
        %v2005 = vadd.f32 %v1801, %v2004
        %2006 = vmatprep.mubr.bf16.mxu0 %v1747
        %2007 = vmatmul.mubr.bf16.gmra.mxu0 %v1746
        %v2008 = vpop.f32.mrf.mxu0
        %v2009 = vadd.f32 %v1797, %v2008
        %v2010 = vpop.f32.mrf.mxu0
        %v2011 = vadd.f32 %v1801, %v2010
        %v2012 = vpop.f32.mrf.mxu0
        %v2013 = vadd.f32 %v1797, %v2012
        %v2014 = vpop.f32.mrf.mxu0
        %v2015 = vadd.f32 %v1801, %v2014
        %2016 = vmatprep.mubr.bf16.mxu0 %v1749
        %2017 = vmatmul.mubr.bf16.gmra.mxu0 %v1748
        %v2018 = vpop.f32.mrf.mxu0
        %v2019 = vadd.f32 %v1797, %v2018
        %v2020 = vpop.f32.mrf.mxu0
        %v2021 = vadd.f32 %v1801, %v2020
        %v2022 = vpop.f32.mrf.mxu0
        %v2023 = vadd.f32 %v1797, %v2022
        %v2024 = vpop.f32.mrf.mxu0
        %v2025 = vadd.f32 %v1801, %v2024
        %2026 = vmatprep.mubr.bf16.mxu0 %v1751
        %2027 = vmatmul.mubr.bf16.gmra.mxu0 %v1750
        %v2028 = vpop.f32.mrf.mxu0
        %v2029 = vadd.f32 %v1797, %v2028
        %v2030 = vpop.f32.mrf.mxu0
        %v2031 = vadd.f32 %v1801, %v2030
        %v2032 = vpop.f32.mrf.mxu0
        %v2033 = vadd.f32 %v1797, %v2032
        %v2034 = vpop.f32.mrf.mxu0
        %v2035 = vadd.f32 %v1801, %v2034
        %2036 = vmatprep.mubr.bf16.mxu0 %v1753
        %2037 = vmatmul.mubr.bf16.gmra.mxu0 %v1752
        %v2038 = vpop.f32.mrf.mxu0
        %v2039 = vadd.f32 %v1797, %v2038
        %v2040 = vpop.f32.mrf.mxu0
        %v2041 = vadd.f32 %v1801, %v2040
        %v2042 = vpop.f32.mrf.mxu0
        %v2043 = vadd.f32 %v1797, %v2042
        %v2044 = vpop.f32.mrf.mxu0
        %v2045 = vadd.f32 %v1801, %v2044
        %2046 = vmatprep.mubr.bf16.mxu0 %v1755
        %2047 = vmatmul.mubr.bf16.gmra.mxu0 %v1754
        %v2048 = vpop.f32.mrf.mxu0
        %v2049 = vadd.f32 %v1797, %v2048
        %v2050 = vpop.f32.mrf.mxu0
        %v2051 = vadd.f32 %v1801, %v2050
        %v2052 = vpop.f32.mrf.mxu0
        %v2053 = vadd.f32 %v1797, %v2052
        %v2054 = vpop.f32.mrf.mxu0
        %v2055 = vadd.f32 %v1801, %v2054
        %2056 = vmatprep.mubr.bf16.mxu0 %v1757
        %2057 = vmatmul.mubr.bf16.gmra.mxu0 %v1756
        %v2058 = vpop.f32.mrf.mxu0
        %v2059 = vadd.f32 %v1797, %v2058
        %v2060 = vpop.f32.mrf.mxu0
        %v2061 = vadd.f32 %v1801, %v2060
        %v2062 = vpop.f32.mrf.mxu0
        %v2063 = vadd.f32 %v1797, %v2062
        %v2064 = vpop.f32.mrf.mxu0
        %v2065 = vadd.f32 %v1801, %v2064
        %2066 = vmatprep.mubr.bf16.mxu0 %v1759
        %2067 = vmatmul.mubr.bf16.gmra.mxu0 %v1758
        %v2068 = vpop.f32.mrf.mxu0
        %v2069 = vadd.f32 %v1797, %v2068
        %v2070 = vpop.f32.mrf.mxu0
        %v2071 = vadd.f32 %v1801, %v2070
        %v2072 = vpop.f32.mrf.mxu0
        %v2073 = vadd.f32 %v1797, %v2072
        %v2074 = vpop.f32.mrf.mxu0
        %v2075 = vadd.f32 %v1801, %v2074
        %2076 = vdwg.mxu0
        %v2077 = vmax.f32 %v1999, 0.0
        %v2078 = vmax.f32 %v2001, 0.0
        %v2079 = vmax.f32 %v2003, 0.0
        %v2080 = vmax.f32 %v2005, 0.0
        %v2081 = vmax.f32 %v2009, 0.0
        %v2082 = vmax.f32 %v2011, 0.0
        %v2083 = vmax.f32 %v2013, 0.0
        %v2084 = vmax.f32 %v2015, 0.0
        %v2085 = vmax.f32 %v2019, 0.0
        %v2086 = vmax.f32 %v2021, 0.0
        %v2087 = vmax.f32 %v2023, 0.0
        %v2088 = vmax.f32 %v2025, 0.0
        %v2089 = vmax.f32 %v2029, 0.0
        %v2090 = vmax.f32 %v2031, 0.0
        %v2091 = vmax.f32 %v2033, 0.0
        %v2092 = vmax.f32 %v2035, 0.0
        %v2093 = vmax.f32 %v2039, 0.0
        %v2094 = vmax.f32 %v2041, 0.0
        %v2095 = vmax.f32 %v2043, 0.0
        %v2096 = vmax.f32 %v2045, 0.0
        %v2097 = vmax.f32 %v2049, 0.0
        %v2098 = vmax.f32 %v2051, 0.0
        %v2099 = vmax.f32 %v2053, 0.0
        %v2100 = vmax.f32 %v2055, 0.0
        %v2101 = vmax.f32 %v2059, 0.0
        %v2102 = vmax.f32 %v2061, 0.0
        %v2103 = vmax.f32 %v2063, 0.0
        %v2104 = vmax.f32 %v2065, 0.0
        %v2105 = vmax.f32 %v2069, 0.0
        %v2106 = vmax.f32 %v2071, 0.0
        %v2107 = vmax.f32 %v2073, 0.0
        %v2108 = vmax.f32 %v2075, 0.0
        %v2109 = vld [vmem:[#allocation9] sm:$0xf]
        %v2110 = vld [vmem:[#allocation9 + $0x4] sm:$0xf]
        %v2111 = vld [vmem:[#allocation9 + $0x8] sm:$0xf]
        %v2112 = vld [vmem:[#allocation9 + $0xc] sm:$0xf]
        %v2113 = vld [vmem:[#allocation9 + $0x10] sm:$0xf]
        %v2114 = vld [vmem:[#allocation9 + $0x14] sm:$0xf]
        %v2115 = vld [vmem:[#allocation9 + $0x18] sm:$0xf]
        %v2116 = vld [vmem:[#allocation9 + $0x1c] sm:$0xf]
        %v2117 = vld [vmem:[#allocation9 + $0x20] sm:$0xf]
        %v2118 = vld [vmem:[#allocation9 + $0x24] sm:$0xf]
        %v2119 = vld [vmem:[#allocation9 + $0x28] sm:$0xf]
        %v2120 = vld [vmem:[#allocation9 + $0x2c] sm:$0xf]
        %v2121 = vld [vmem:[#allocation9 + $0x30] sm:$0xf]
        %v2122 = vld [vmem:[#allocation9 + $0x34] sm:$0xf]
        %v2123 = vld [vmem:[#allocation9 + $0x38] sm:$0xf]
        %v2124 = vld [vmem:[#allocation9 + $0x3c] sm:$0xf]
        %v2125 = vld [vmem:[#allocation9 + $0x40] sm:$0xf]
        %v2126 = vld [vmem:[#allocation9 + $0x44] sm:$0xf]
        %v2127 = vld [vmem:[#allocation9 + $0x48] sm:$0xf]
        %v2128 = vld [vmem:[#allocation9 + $0x4c] sm:$0xf]
        %v2129 = vld [vmem:[#allocation9 + $0x50] sm:$0xf]
        %v2130 = vld [vmem:[#allocation9 + $0x54] sm:$0xf]
        %v2131 = vld [vmem:[#allocation9 + $0x58] sm:$0xf]
        %v2132 = vld [vmem:[#allocation9 + $0x5c] sm:$0xf]
        %v2133 = vld [vmem:[#allocation9 + $0x60] sm:$0xf]
        %v2134 = vld [vmem:[#allocation9 + $0x64] sm:$0xf]
        %v2135 = vld [vmem:[#allocation9 + $0x68] sm:$0xf]
        %v2136 = vld [vmem:[#allocation9 + $0x6c] sm:$0xf]
        %v2137 = vld [vmem:[#allocation9 + $0x70] sm:$0xf]
        %v2138 = vld [vmem:[#allocation9 + $0x74] sm:$0xf]
        %v2139 = vld [vmem:[#allocation9 + $0x78] sm:$0xf]
        %v2140 = vld [vmem:[#allocation9 + $0x7c] sm:$0xf]
        %v2141 = vld [vmem:[#allocation9 + $0x80] sm:$0xf]
        %v2142 = vld [vmem:[#allocation9 + $0x84] sm:$0xf]
        %v2143 = vld [vmem:[#allocation9 + $0x88] sm:$0xf]
        %v2144 = vld [vmem:[#allocation9 + $0x8c] sm:$0xf]
        %v2145 = vld [vmem:[#allocation9 + $0x90] sm:$0xf]
        %v2146 = vld [vmem:[#allocation9 + $0x94] sm:$0xf]
        %v2147 = vld [vmem:[#allocation9 + $0x98] sm:$0xf]
        %v2148 = vld [vmem:[#allocation9 + $0x9c] sm:$0xf]
        %v2149 = vld [vmem:[#allocation9 + $0xa0] sm:$0xf]
        %v2150 = vld [vmem:[#allocation9 + $0xa4] sm:$0xf]
        %v2151 = vld [vmem:[#allocation9 + $0xa8] sm:$0xf]
        %v2152 = vld [vmem:[#allocation9 + $0xac] sm:$0xf]
        %v2153 = vld [vmem:[#allocation9 + $0xb0] sm:$0xf]
        %v2154 = vld [vmem:[#allocation9 + $0xb4] sm:$0xf]
        %v2155 = vld [vmem:[#allocation9 + $0xb8] sm:$0xf]
        %v2156 = vld [vmem:[#allocation9 + $0xbc] sm:$0xf]
        %v2157 = vld [vmem:[#allocation9 + $0xc0] sm:$0xf]
        %v2158 = vld [vmem:[#allocation9 + $0xc4] sm:$0xf]
        %v2159 = vld [vmem:[#allocation9 + $0xc8] sm:$0xf]
        %v2160 = vld [vmem:[#allocation9 + $0xcc] sm:$0xf]
        %v2161 = vld [vmem:[#allocation9 + $0xd0] sm:$0xf]
        %v2162 = vld [vmem:[#allocation9 + $0xd4] sm:$0xf]
        %v2163 = vld [vmem:[#allocation9 + $0xd8] sm:$0xf]
        %v2164 = vld [vmem:[#allocation9 + $0xdc] sm:$0xf]
        %v2165 = vld [vmem:[#allocation9 + $0xe0] sm:$0xf]
        %v2166 = vld [vmem:[#allocation9 + $0xe4] sm:$0xf]
        %v2167 = vld [vmem:[#allocation9 + $0xe8] sm:$0xf]
        %v2168 = vld [vmem:[#allocation9 + $0xec] sm:$0xf]
        %v2169 = vld [vmem:[#allocation9 + $0xf0] sm:$0xf]
        %v2170 = vld [vmem:[#allocation9 + $0xf4] sm:$0xf]
        %v2171 = vld [vmem:[#allocation9 + $0xf8] sm:$0xf]
        %v2172 = vld [vmem:[#allocation9 + $0xfc] sm:$0xf]
        %v2173 = vpack.c.bf16 %v2079, %v2077
        %v2174 = vpack.c.bf16 %v2080, %v2078
        %v2175 = vpack.c.bf16 %v2083, %v2081
        %v2176 = vpack.c.bf16 %v2084, %v2082
        %v2177 = vpack.c.bf16 %v2087, %v2085
        %v2178 = vpack.c.bf16 %v2088, %v2086
        %v2179 = vpack.c.bf16 %v2091, %v2089
        %v2180 = vpack.c.bf16 %v2092, %v2090
        %v2181 = vpack.c.bf16 %v2095, %v2093
        %v2182 = vpack.c.bf16 %v2096, %v2094
        %v2183 = vpack.c.bf16 %v2099, %v2097
        %v2184 = vpack.c.bf16 %v2100, %v2098
        %v2185 = vpack.c.bf16 %v2103, %v2101
        %v2186 = vpack.c.bf16 %v2104, %v2102
        %v2187 = vpack.c.bf16 %v2107, %v2105
        %v2188 = vpack.c.bf16 %v2108, %v2106
        %v2221 = vunpack.c.l.b16 %v2141
        %v2222 = vunpack.c.l.b16 %v2142
        %v2223 = vunpack.c.l.b16 %v2143
        %v2224 = vunpack.c.l.b16 %v2144
        %v2225 = vunpack.c.l.b16 %v2145
        %v2226 = vunpack.c.l.b16 %v2146
        %v2227 = vunpack.c.l.b16 %v2147
        %v2228 = vunpack.c.l.b16 %v2148
        %v2229 = vunpack.c.l.b16 %v2149
        %v2230 = vunpack.c.l.b16 %v2150
        %v2231 = vunpack.c.l.b16 %v2151
        %v2232 = vunpack.c.l.b16 %v2152
        %v2233 = vunpack.c.l.b16 %v2153
        %v2234 = vunpack.c.l.b16 %v2154
        %v2235 = vunpack.c.l.b16 %v2155
        %v2236 = vunpack.c.l.b16 %v2156
        %v2237 = vunpack.c.l.b16 %v2157
        %v2238 = vunpack.c.l.b16 %v2158
        %v2239 = vunpack.c.l.b16 %v2159
        %v2240 = vunpack.c.l.b16 %v2160
        %v2241 = vunpack.c.l.b16 %v2161
        %v2242 = vunpack.c.l.b16 %v2162
        %v2243 = vunpack.c.l.b16 %v2163
        %v2244 = vunpack.c.l.b16 %v2164
        %v2245 = vunpack.c.l.b16 %v2165
        %v2246 = vunpack.c.l.b16 %v2166
        %v2247 = vunpack.c.l.b16 %v2167
        %v2248 = vunpack.c.l.b16 %v2168
        %v2249 = vunpack.c.l.b16 %v2169
        %v2250 = vunpack.c.l.b16 %v2170
        %v2251 = vunpack.c.l.b16 %v2171
        %v2252 = vunpack.c.l.b16 %v2172
        %v2253 = vpack.c.b16 %v2222, %v2221
        %v2254 = vpack.c.b16 %v2224, %v2223
        %v2255 = vpack.c.b16 %v2226, %v2225
        %v2256 = vpack.c.b16 %v2228, %v2227
        %v2257 = vpack.c.b16 %v2230, %v2229
        %v2258 = vpack.c.b16 %v2232, %v2231
        %v2259 = vpack.c.b16 %v2234, %v2233
        %v2260 = vpack.c.b16 %v2236, %v2235
        %v2261 = vpack.c.b16 %v2238, %v2237
        %v2262 = vpack.c.b16 %v2240, %v2239
        %v2263 = vpack.c.b16 %v2242, %v2241
        %v2264 = vpack.c.b16 %v2244, %v2243
        %v2265 = vpack.c.b16 %v2246, %v2245
        %v2266 = vpack.c.b16 %v2248, %v2247
        %v2267 = vpack.c.b16 %v2250, %v2249
        %v2268 = vpack.c.b16 %v2252, %v2251
        %2285 = vmatprep.subr.bf16.mxu0 0
        %2286 = vmatpush1.bf16.msra.mxu0 %v2260
        %2287 = vmatprep.subr.bf16.mxu0 0
        %2288 = vmatpush1.bf16.msra.mxu0 %v2259
        %2289 = vmatprep.subr.bf16.mxu0 0
        %2290 = vmatpush1.bf16.msra.mxu0 %v2258
        %2291 = vmatprep.subr.bf16.mxu0 0
        %2292 = vmatpush1.bf16.msra.mxu0 %v2257
        %2293 = vmatprep.subr.bf16.mxu0 0
        %2294 = vmatpush1.bf16.msra.mxu0 %v2256
        %2295 = vmatprep.subr.bf16.mxu0 0
        %2296 = vmatpush1.bf16.msra.mxu0 %v2255
        %2297 = vmatprep.subr.bf16.mxu0 0
        %2298 = vmatpush1.bf16.msra.mxu0 %v2254
        %2299 = vmatprep.subr.bf16.mxu0 0
        %2300 = vmatpush1.bf16.msra.mxu0 %v2253
        %2301 = vmatprep.subr.bf16.mxu0 0
        %2302 = vmatpush2.bf16.msra.mxu0 %v2268
        %2303 = vmatprep.subr.bf16.mxu0 0
        %2304 = vmatpush2.bf16.msra.mxu0 %v2267
        %2305 = vmatprep.subr.bf16.mxu0 0
        %2306 = vmatpush2.bf16.msra.mxu0 %v2266
        %2307 = vmatprep.subr.bf16.mxu0 0
        %2308 = vmatpush2.bf16.msra.mxu0 %v2265
        %2309 = vmatprep.subr.bf16.mxu0 0
        %2310 = vmatpush2.bf16.msra.mxu0 %v2264
        %2311 = vmatprep.subr.bf16.mxu0 0
        %2312 = vmatpush2.bf16.msra.mxu0 %v2263
        %2313 = vmatprep.subr.bf16.mxu0 0
        %2314 = vmatpush2.bf16.msra.mxu0 %v2262
        %2315 = vmatprep.subr.bf16.mxu0 0
        %2316 = vmatpush2.bf16.msra.mxu0 %v2261
        %2317 = vmatprep.mubr.bf16.mxu0 %v2174
        %2318 = vmatmul.mubr.bf16.gmra.mxu0 %v2173
        %v2319 = vpop.f32.mrf.mxu0
        %v2320 = vadd.f32 0.0, %v2319
        %v2321 = vpop.f32.mrf.mxu0
        %v2322 = vpop.f32.mrf.mxu0
        %v2323 = vadd.f32 0.0, %v2322
        %v2324 = vpop.f32.mrf.mxu0
        %2325 = vmatprep.mubr.bf16.mxu0 %v2176
        %2326 = vmatmul.mubr.bf16.gmra.mxu0 %v2175
        %v2327 = vpop.f32.mrf.mxu0
        %v2328 = vadd.f32 0.0, %v2327
        %v2329 = vpop.f32.mrf.mxu0
        %v2330 = vpop.f32.mrf.mxu0
        %v2331 = vadd.f32 0.0, %v2330
        %v2332 = vpop.f32.mrf.mxu0
        %2333 = vmatprep.mubr.bf16.mxu0 %v2178
        %2334 = vmatmul.mubr.bf16.gmra.mxu0 %v2177
        %v2335 = vpop.f32.mrf.mxu0
        %v2336 = vadd.f32 0.0, %v2335
        %v2337 = vpop.f32.mrf.mxu0
        %v2338 = vpop.f32.mrf.mxu0
        %v2339 = vadd.f32 0.0, %v2338
        %v2340 = vpop.f32.mrf.mxu0
        %2341 = vmatprep.mubr.bf16.mxu0 %v2180
        %2342 = vmatmul.mubr.bf16.gmra.mxu0 %v2179
        %v2343 = vpop.f32.mrf.mxu0
        %v2344 = vadd.f32 0.0, %v2343
        %v2345 = vpop.f32.mrf.mxu0
        %v2346 = vpop.f32.mrf.mxu0
        %v2347 = vadd.f32 0.0, %v2346
        %v2348 = vpop.f32.mrf.mxu0
        %2349 = vmatprep.mubr.bf16.mxu0 %v2182
        %2350 = vmatmul.mubr.bf16.gmra.mxu0 %v2181
        %v2351 = vpop.f32.mrf.mxu0
        %v2352 = vadd.f32 0.0, %v2351
        %v2353 = vpop.f32.mrf.mxu0
        %v2354 = vpop.f32.mrf.mxu0
        %v2355 = vadd.f32 0.0, %v2354
        %v2356 = vpop.f32.mrf.mxu0
        %2357 = vmatprep.mubr.bf16.mxu0 %v2184
        %2358 = vmatmul.mubr.bf16.gmra.mxu0 %v2183
        %v2359 = vpop.f32.mrf.mxu0
        %v2360 = vadd.f32 0.0, %v2359
        %v2361 = vpop.f32.mrf.mxu0
        %v2362 = vpop.f32.mrf.mxu0
        %v2363 = vadd.f32 0.0, %v2362
        %v2364 = vpop.f32.mrf.mxu0
        %2365 = vmatprep.mubr.bf16.mxu0 %v2186
        %2366 = vmatmul.mubr.bf16.gmra.mxu0 %v2185
        %v2367 = vpop.f32.mrf.mxu0
        %v2368 = vadd.f32 0.0, %v2367
        %v2369 = vpop.f32.mrf.mxu0
        %v2370 = vpop.f32.mrf.mxu0
        %v2371 = vadd.f32 0.0, %v2370
        %v2372 = vpop.f32.mrf.mxu0
        %2373 = vmatprep.mubr.bf16.mxu0 %v2188
        %2374 = vmatmul.mubr.bf16.gmra.mxu0 %v2187
        %v2375 = vpop.f32.mrf.mxu0
        %v2376 = vadd.f32 0.0, %v2375
        %v2377 = vpop.f32.mrf.mxu0
        %v2378 = vpop.f32.mrf.mxu0
        %v2379 = vadd.f32 0.0, %v2378
        %v2380 = vpop.f32.mrf.mxu0
        %2381 = vdwg.mxu0
        %v2414 = vunpack.c.l.b16 %v2109
        %v2415 = vunpack.c.l.b16 %v2110
        %v2416 = vunpack.c.l.b16 %v2111
        %v2417 = vunpack.c.l.b16 %v2112
        %v2418 = vunpack.c.l.b16 %v2113
        %v2419 = vunpack.c.l.b16 %v2114
        %v2420 = vunpack.c.l.b16 %v2115
        %v2421 = vunpack.c.l.b16 %v2116
        %v2422 = vunpack.c.l.b16 %v2117
        %v2423 = vunpack.c.l.b16 %v2118
        %v2424 = vunpack.c.l.b16 %v2119
        %v2425 = vunpack.c.l.b16 %v2120
        %v2426 = vunpack.c.l.b16 %v2121
        %v2427 = vunpack.c.l.b16 %v2122
        %v2428 = vunpack.c.l.b16 %v2123
        %v2429 = vunpack.c.l.b16 %v2124
        %v2430 = vunpack.c.l.b16 %v2125
        %v2431 = vunpack.c.l.b16 %v2126
        %v2432 = vunpack.c.l.b16 %v2127
        %v2433 = vunpack.c.l.b16 %v2128
        %v2434 = vunpack.c.l.b16 %v2129
        %v2435 = vunpack.c.l.b16 %v2130
        %v2436 = vunpack.c.l.b16 %v2131
        %v2437 = vunpack.c.l.b16 %v2132
        %v2438 = vunpack.c.l.b16 %v2133
        %v2439 = vunpack.c.l.b16 %v2134
        %v2440 = vunpack.c.l.b16 %v2135
        %v2441 = vunpack.c.l.b16 %v2136
        %v2442 = vunpack.c.l.b16 %v2137
        %v2443 = vunpack.c.l.b16 %v2138
        %v2444 = vunpack.c.l.b16 %v2139
        %v2445 = vunpack.c.l.b16 %v2140
        %v2446 = vpack.c.b16 %v2415, %v2414
        %v2447 = vpack.c.b16 %v2417, %v2416
        %v2448 = vpack.c.b16 %v2419, %v2418
        %v2449 = vpack.c.b16 %v2421, %v2420
        %v2450 = vpack.c.b16 %v2423, %v2422
        %v2451 = vpack.c.b16 %v2425, %v2424
        %v2452 = vpack.c.b16 %v2427, %v2426
        %v2453 = vpack.c.b16 %v2429, %v2428
        %v2454 = vpack.c.b16 %v2431, %v2430
        %v2455 = vpack.c.b16 %v2433, %v2432
        %v2456 = vpack.c.b16 %v2435, %v2434
        %v2457 = vpack.c.b16 %v2437, %v2436
        %v2458 = vpack.c.b16 %v2439, %v2438
        %v2459 = vpack.c.b16 %v2441, %v2440
        %v2460 = vpack.c.b16 %v2443, %v2442
        %v2461 = vpack.c.b16 %v2445, %v2444
        %2478 = vmatprep.subr.bf16.mxu0 0
        %2479 = vmatpush1.bf16.msra.mxu0 %v2453
        %2480 = vmatprep.subr.bf16.mxu0 0
        %2481 = vmatpush1.bf16.msra.mxu0 %v2452
        %2482 = vmatprep.subr.bf16.mxu0 0
        %2483 = vmatpush1.bf16.msra.mxu0 %v2451
        %2484 = vmatprep.subr.bf16.mxu0 0
        %2485 = vmatpush1.bf16.msra.mxu0 %v2450
        %2486 = vmatprep.subr.bf16.mxu0 0
        %2487 = vmatpush1.bf16.msra.mxu0 %v2449
        %2488 = vmatprep.subr.bf16.mxu0 0
        %2489 = vmatpush1.bf16.msra.mxu0 %v2448
        %2490 = vmatprep.subr.bf16.mxu0 0
        %2491 = vmatpush1.bf16.msra.mxu0 %v2447
        %2492 = vmatprep.subr.bf16.mxu0 0
        %2493 = vmatpush1.bf16.msra.mxu0 %v2446
        %2494 = vmatprep.subr.bf16.mxu0 0
        %2495 = vmatpush2.bf16.msra.mxu0 %v2461
        %2496 = vmatprep.subr.bf16.mxu0 0
        %2497 = vmatpush2.bf16.msra.mxu0 %v2460
        %2498 = vmatprep.subr.bf16.mxu0 0
        %2499 = vmatpush2.bf16.msra.mxu0 %v2459
        %2500 = vmatprep.subr.bf16.mxu0 0
        %2501 = vmatpush2.bf16.msra.mxu0 %v2458
        %2502 = vmatprep.subr.bf16.mxu0 0
        %2503 = vmatpush2.bf16.msra.mxu0 %v2457
        %2504 = vmatprep.subr.bf16.mxu0 0
        %2505 = vmatpush2.bf16.msra.mxu0 %v2456
        %2506 = vmatprep.subr.bf16.mxu0 0
        %2507 = vmatpush2.bf16.msra.mxu0 %v2455
        %2508 = vmatprep.subr.bf16.mxu0 0
        %2509 = vmatpush2.bf16.msra.mxu0 %v2454
        %2510 = vmatprep.mubr.bf16.mxu0 %v1074
        %2511 = vmatmul.mubr.bf16.gmra.mxu0 %v1073
        %v2512 = vpop.f32.mrf.mxu0
        %v2513 = vadd.f32 %v2320, %v2512
        %v2514 = vpop.f32.mrf.mxu0
        %v2515 = vpop.f32.mrf.mxu0
        %v2516 = vadd.f32 %v2323, %v2515
        %v2517 = vpop.f32.mrf.mxu0
        %2518 = vmatprep.mubr.bf16.mxu0 %v1076
        %2519 = vmatmul.mubr.bf16.gmra.mxu0 %v1075
        %v2520 = vpop.f32.mrf.mxu0
        %v2521 = vadd.f32 %v2328, %v2520
        %v2522 = vpop.f32.mrf.mxu0
        %v2523 = vpop.f32.mrf.mxu0
        %v2524 = vadd.f32 %v2331, %v2523
        %v2525 = vpop.f32.mrf.mxu0
        %2526 = vmatprep.mubr.bf16.mxu0 %v1078
        %2527 = vmatmul.mubr.bf16.gmra.mxu0 %v1077
        %v2528 = vpop.f32.mrf.mxu0
        %v2529 = vadd.f32 %v2336, %v2528
        %v2530 = vpop.f32.mrf.mxu0
        %v2531 = vpop.f32.mrf.mxu0
        %v2532 = vadd.f32 %v2339, %v2531
        %v2533 = vpop.f32.mrf.mxu0
        %2534 = vmatprep.mubr.bf16.mxu0 %v1080
        %2535 = vmatmul.mubr.bf16.gmra.mxu0 %v1079
        %v2536 = vpop.f32.mrf.mxu0
        %v2537 = vadd.f32 %v2344, %v2536
        %v2538 = vpop.f32.mrf.mxu0
        %v2539 = vpop.f32.mrf.mxu0
        %v2540 = vadd.f32 %v2347, %v2539
        %v2541 = vpop.f32.mrf.mxu0
        %2542 = vmatprep.mubr.bf16.mxu0 %v1082
        %2543 = vmatmul.mubr.bf16.gmra.mxu0 %v1081
        %v2544 = vpop.f32.mrf.mxu0
        %v2545 = vadd.f32 %v2352, %v2544
        %v2546 = vpop.f32.mrf.mxu0
        %v2547 = vpop.f32.mrf.mxu0
        %v2548 = vadd.f32 %v2355, %v2547
        %v2549 = vpop.f32.mrf.mxu0
        %2550 = vmatprep.mubr.bf16.mxu0 %v1084
        %2551 = vmatmul.mubr.bf16.gmra.mxu0 %v1083
        %v2552 = vpop.f32.mrf.mxu0
        %v2553 = vadd.f32 %v2360, %v2552
        %v2554 = vpop.f32.mrf.mxu0
        %v2555 = vpop.f32.mrf.mxu0
        %v2556 = vadd.f32 %v2363, %v2555
        %v2557 = vpop.f32.mrf.mxu0
        %2558 = vmatprep.mubr.bf16.mxu0 %v1086
        %2559 = vmatmul.mubr.bf16.gmra.mxu0 %v1085
        %v2560 = vpop.f32.mrf.mxu0
        %v2561 = vadd.f32 %v2368, %v2560
        %v2562 = vpop.f32.mrf.mxu0
        %v2563 = vpop.f32.mrf.mxu0
        %v2564 = vadd.f32 %v2371, %v2563
        %v2565 = vpop.f32.mrf.mxu0
        %2566 = vmatprep.mubr.bf16.mxu0 %v1088
        %2567 = vmatmul.mubr.bf16.gmra.mxu0 %v1087
        %v2568 = vpop.f32.mrf.mxu0
        %v2569 = vadd.f32 %v2376, %v2568
        %v2570 = vpop.f32.mrf.mxu0
        %v2571 = vpop.f32.mrf.mxu0
        %v2572 = vadd.f32 %v2379, %v2571
        %v2573 = vpop.f32.mrf.mxu0
        %2574 = vdwg.mxu0
        %v2575 = vld [vmem:[%s12] sm:$0x1]
        %v2577 = vlaneseq
        %v2578 = vshrl.u32 %v2577, 7
        %v2579 = vsub.s32 0, %v2578
        %v2580 = vrot.slane %v2575, %v2579
        %v2582 = vadd.f32 %v2513, %v2580
        %v2583 = vadd.f32 %v2516, %v2580
        %v2584 = vadd.f32 %v2521, %v2580
        %v2585 = vadd.f32 %v2524, %v2580
        %v2586 = vadd.f32 %v2529, %v2580
        %v2587 = vadd.f32 %v2532, %v2580
        %v2588 = vadd.f32 %v2537, %v2580
        %v2589 = vadd.f32 %v2540, %v2580
        %v2590 = vadd.f32 %v2545, %v2580
        %v2591 = vadd.f32 %v2548, %v2580
        %v2592 = vadd.f32 %v2553, %v2580
        %v2593 = vadd.f32 %v2556, %v2580
        %v2594 = vadd.f32 %v2561, %v2580
        %v2595 = vadd.f32 %v2564, %v2580
        %v2596 = vadd.f32 %v2569, %v2580
        %v2597 = vadd.f32 %v2572, %v2580
        %v2598 = vmax.f32 %v2582, 0.0
        %v2599 = vmax.f32 %v2583, 0.0
        %v2600 = vmax.f32 %v2584, 0.0
        %v2601 = vmax.f32 %v2585, 0.0
        %v2602 = vmax.f32 %v2586, 0.0
        %v2603 = vmax.f32 %v2587, 0.0
        %v2604 = vmax.f32 %v2588, 0.0
        %v2605 = vmax.f32 %v2589, 0.0
        %v2606 = vmax.f32 %v2590, 0.0
        %v2607 = vmax.f32 %v2591, 0.0
        %v2608 = vmax.f32 %v2592, 0.0
        %v2609 = vmax.f32 %v2593, 0.0
        %v2610 = vmax.f32 %v2594, 0.0
        %v2611 = vmax.f32 %v2595, 0.0
        %v2612 = vmax.f32 %v2596, 0.0
        %v2613 = vmax.f32 %v2597, 0.0
        %v2614 = vld [vmem:[%s13] sm:$0x1]
        %v2615 = vpack.c.bf16 %v2599, %v2598
        %v2616 = vpack.c.bf16 %v2601, %v2600
        %v2617 = vpack.c.bf16 %v2603, %v2602
        %v2618 = vpack.c.bf16 %v2605, %v2604
        %v2619 = vpack.c.bf16 %v2607, %v2606
        %v2620 = vpack.c.bf16 %v2609, %v2608
        %v2621 = vpack.c.bf16 %v2611, %v2610
        %v2622 = vpack.c.bf16 %v2613, %v2612
        %v2623 = vld [vmem:[#allocation2] sm:$0x1]
        %2625 = vset.pattern.permute.xlu0 0
        %2626 = vperm.xlu0 %2625, %v2623
        %v2627 = vpop.permute.xlu0 %2626
        %v2629 = vlaneseq
        %v2630 = vshrl.u32 %v2629, 7
        %v2631 = vsub.s32 0, %v2630
        %v2632 = vrot.slane %v2627, %v2631
        %2633 = vmatprep.subr.bf16.mxu0 0
        %2634 = vmatpush1.bf16.xpose.msra.mxu0 %v2622
        %2635 = vmatprep.subr.bf16.mxu0 0
        %2636 = vmatpush1.bf16.xpose.msra.mxu0 %v2621
        %2637 = vmatprep.subr.bf16.mxu0 0
        %2638 = vmatpush1.bf16.xpose.msra.mxu0 %v2620
        %2639 = vmatprep.subr.bf16.mxu0 0
        %2640 = vmatpush1.bf16.xpose.msra.mxu0 %v2619
        %2641 = vmatprep.subr.bf16.mxu0 0
        %2642 = vmatpush1.bf16.xpose.msra.mxu0 %v2618
        %2643 = vmatprep.subr.bf16.mxu0 0
        %2644 = vmatpush1.bf16.xpose.msra.mxu0 %v2617
        %2645 = vmatprep.subr.bf16.mxu0 0
        %2646 = vmatpush1.bf16.xpose.msra.mxu0 %v2616
        %2647 = vmatprep.subr.bf16.mxu0 0
        %2648 = vmatpush1.bf16.xpose.msra.mxu0 %v2615
        %2649 = vmatprep.subr.bf16.mxu0 0
        %2650 = vmatpush2.bf16.xpose.msra.mxu0 0
        %2651 = vmatprep.subr.bf16.mxu0 0
        %2652 = vmatpush2.bf16.xpose.msra.mxu0 0
        %2653 = vmatprep.subr.bf16.mxu0 0
        %2654 = vmatpush2.bf16.xpose.msra.mxu0 0
        %2655 = vmatprep.subr.bf16.mxu0 0
        %2656 = vmatpush2.bf16.xpose.msra.mxu0 0
        %2657 = vmatprep.subr.bf16.mxu0 0
        %2658 = vmatpush2.bf16.xpose.msra.mxu0 0
        %2659 = vmatprep.subr.bf16.mxu0 0
        %2660 = vmatpush2.bf16.xpose.msra.mxu0 0
        %2661 = vmatprep.subr.bf16.mxu0 0
        %2662 = vmatpush2.bf16.xpose.msra.mxu0 0
        %2663 = vmatprep.subr.bf16.mxu0 0
        %2664 = vmatpush2.bf16.xpose.msra.mxu0 0
        %2665 = vmatprep.mubr.bf16.mxu0 0
        %2666 = vmatmul.mubr.bf16.gmra.mxu0 %v2614
        %v2667 = vpop.f32.mrf.mxu0
        %v2668 = vadd.f32 %v2632, %v2667
        %v2669 = vpop.f32.mrf.mxu0
        %v2670 = vpop.f32.mrf.mxu0
        %v2671 = vpop.f32.mrf.mxu0
        %2672 = vdwg.mxu0
        %v2673 = vld [vmem:[%s2] sm:$0xff]
        %v2674 = vld [vmem:[%s2 + $0x8] sm:$0xff]
        %v2675 = vlaneseq
        %v2676 = vshrl.u32 %v2675, 7
        %v2677 = vsub.s32 0, %v2676
        %v2678 = vrot.slane %v2668, %v2677
        %v2679 = vadd.f32 %v2678, %v2673
        %v2680 = vadd.f32 %v2678, %v2674
        %2681 = vmax.xlane.f32.xlu0 %v2679
        %v2682 = vpop.xlane.xlu0 %2681
        %2683 = vmax.xlane.f32.xlu0 %v2680
        %v2684 = vpop.xlane.xlu0 %2683
        %v2685 = vsub.f32 %v2679, %v2682
        %v2686 = vsub.f32 %v2680, %v2684
        %v2687 = vmul.f32 %v2685, 1.442695
        %v2688 = vpow.pop %v2687
        %v2689 = vmul.f32 %v2686, 1.442695
        %v2690 = vpow.pop %v2689
        %2691 = vadd.xlane.f32.xlu0 %v2688
        %v2692 = vpop.xlane.xlu0 %2691
        %2693 = vadd.xlane.f32.xlu0 %v2690
        %v2694 = vpop.xlane.xlu0 %2693
        %v2695 = vrcp.pop %v2692
        %v2696 = vmul.f32 %v2688, %v2695
        %v2697 = vrcp.pop %v2694
        %v2698 = vmul.f32 %v2690, %v2697
        %v2699 = vpack.c.bf16 %v2698, %v2696
        %2700 = vmatprep.subr.bf16.mxu0 %v1088
        %2701 = vmatpush1.bf16.msra.mxu0 %v1087
        %2702 = vmatprep.subr.bf16.mxu0 %v1086
        %2703 = vmatpush1.bf16.msra.mxu0 %v1085
        %2704 = vmatprep.subr.bf16.mxu0 %v1084
        %2705 = vmatpush1.bf16.msra.mxu0 %v1083
        %2706 = vmatprep.subr.bf16.mxu0 %v1082
        %2707 = vmatpush1.bf16.msra.mxu0 %v1081
        %2708 = vmatprep.subr.bf16.mxu0 %v1080
        %2709 = vmatpush1.bf16.msra.mxu0 %v1079
        %2710 = vmatprep.subr.bf16.mxu0 %v1078
        %2711 = vmatpush1.bf16.msra.mxu0 %v1077
        %2712 = vmatprep.subr.bf16.mxu0 %v1076
        %2713 = vmatpush1.bf16.msra.mxu0 %v1075
        %2714 = vmatprep.subr.bf16.mxu0 %v1074
        %2715 = vmatpush1.bf16.msra.mxu0 %v1073
        %2716 = vmatprep.subr.bf16.mxu0 0
        %2717 = vmatpush2.bf16.msra.mxu0 0
        %2718 = vmatprep.subr.bf16.mxu0 0
        %2719 = vmatpush2.bf16.msra.mxu0 0
        %2720 = vmatprep.subr.bf16.mxu0 0
        %2721 = vmatpush2.bf16.msra.mxu0 0
        %2722 = vmatprep.subr.bf16.mxu0 0
        %2723 = vmatpush2.bf16.msra.mxu0 0
        %2724 = vmatprep.subr.bf16.mxu0 0
        %2725 = vmatpush2.bf16.msra.mxu0 0
        %2726 = vmatprep.subr.bf16.mxu0 0
        %2727 = vmatpush2.bf16.msra.mxu0 0
        %2728 = vmatprep.subr.bf16.mxu0 0
        %2729 = vmatpush2.bf16.msra.mxu0 0
        %2730 = vmatprep.subr.bf16.mxu0 0
        %2731 = vmatpush2.bf16.msra.mxu0 0
        %2732 = vmatprep.mubr.bf16.mxu0 0
        %2733 = vmatmul.mubr.bf16.gmra.mxu0 %v2699
        %v2734 = vpop.f32.mrf.mxu0
        %v2735 = vadd.f32 0.0, %v2734
        %v2736 = vpop.f32.mrf.mxu0
        %v2737 = vadd.f32 0.0, %v2736
        %v2738 = vpop.f32.mrf.mxu0
        %v2739 = vadd.f32 0.0, %v2738
        %v2740 = vpop.f32.mrf.mxu0
        %v2741 = vadd.f32 0.0, %v2740
        %2742 = vdwg.mxu0
        %2743 = vmatprep.subr.bf16.mxu0 %v2188
        %2744 = vmatpush1.bf16.msra.mxu0 %v2187
        %2745 = vmatprep.subr.bf16.mxu0 %v2186
        %2746 = vmatpush1.bf16.msra.mxu0 %v2185
        %2747 = vmatprep.subr.bf16.mxu0 %v2184
        %2748 = vmatpush1.bf16.msra.mxu0 %v2183
        %2749 = vmatprep.subr.bf16.mxu0 %v2182
        %2750 = vmatpush1.bf16.msra.mxu0 %v2181
        %2751 = vmatprep.subr.bf16.mxu0 %v2180
        %2752 = vmatpush1.bf16.msra.mxu0 %v2179
        %2753 = vmatprep.subr.bf16.mxu0 %v2178
        %2754 = vmatpush1.bf16.msra.mxu0 %v2177
        %2755 = vmatprep.subr.bf16.mxu0 %v2176
        %2756 = vmatpush1.bf16.msra.mxu0 %v2175
        %2757 = vmatprep.subr.bf16.mxu0 %v2174
        %2758 = vmatpush1.bf16.msra.mxu0 %v2173
        %2759 = vmatprep.subr.bf16.mxu0 0
        %2760 = vmatpush2.bf16.msra.mxu0 0
        %2761 = vmatprep.subr.bf16.mxu0 0
        %2762 = vmatpush2.bf16.msra.mxu0 0
        %2763 = vmatprep.subr.bf16.mxu0 0
        %2764 = vmatpush2.bf16.msra.mxu0 0
        %2765 = vmatprep.subr.bf16.mxu0 0
        %2766 = vmatpush2.bf16.msra.mxu0 0
        %2767 = vmatprep.subr.bf16.mxu0 0
        %2768 = vmatpush2.bf16.msra.mxu0 0
        %2769 = vmatprep.subr.bf16.mxu0 0
        %2770 = vmatpush2.bf16.msra.mxu0 0
        %2771 = vmatprep.subr.bf16.mxu0 0
        %2772 = vmatpush2.bf16.msra.mxu0 0
        %2773 = vmatprep.subr.bf16.mxu0 0
        %2774 = vmatpush2.bf16.msra.mxu0 0
        %2775 = vmatprep.mubr.bf16.mxu0 0
        %2776 = vmatmul.mubr.bf16.gmra.mxu0 %v2699
        %v2777 = vpop.f32.mrf.mxu0
        %v2778 = vadd.f32 0.0, %v2777
        %v2779 = vpop.f32.mrf.mxu0
        %v2780 = vadd.f32 0.0, %v2779
        %v2781 = vpop.f32.mrf.mxu0
        %v2782 = vadd.f32 0.0, %v2781
        %v2783 = vpop.f32.mrf.mxu0
        %v2784 = vadd.f32 0.0, %v2783
        %2785 = vdwg.mxu0
        %2786 = vst [vmem:[%s565] sm:$0xff] %v2735
        %2787 = vst [vmem:[%s565 + $0x8] sm:$0xff] %v2737
        %2788 = vst [vmem:[%s565 + $0x10] sm:$0xff] %v2778
        %2789 = vst [vmem:[%s565 + $0x18] sm:$0xff] %v2780
        %2790 = vst [vmem:[%s565 + $0x20] sm:$0xff] %v2739
        %2791 = vst [vmem:[%s565 + $0x28] sm:$0xff] %v2741
        %2792 = vst [vmem:[%s565 + $0x30] sm:$0xff] %v2782
        %2793 = vst [vmem:[%s565 + $0x38] sm:$0xff] %v2784
        %s2794 = sand.u32 %s367, 1
        %s2795 = scalar_lea.sflag [#allocation5], %s2794
        %s2796 = sand.u32 %s367, 1
        %s2797 = smul.addr %s2796, 64
        %s2798 = scalar_lea.vmem [#allocation11], %s2797
        // Predicated region
        $region97: #{tpu_custom_call.1} parent=79 // pred_check
          %p2799 = pneg %p377
        $region98: #{tpu_custom_call.1} parent=79 // pred_check_branch
          %2801 = sbr.rel (%p2799) target = $region100
        $region99: #{tpu_custom_call.1} parent=79 // pred_region
          %s2803 = ssub.s32 1024, 1024
          %2804 = vsyncadd %s2795, %s2803
          %s2805 = smul.addr %s34, 8
          %s2806 = smul.addr %s2805, 128
          %s2807 = scalar_lea.hbm %s15, %s2806
          %s2808 = sshll.u32 %s2798, 4
          %s2809 = int_to_ptr.vmem [resolvable:$true] %s2808
          %2814 = dma.vmem_to_hbm [thread:$0]  %s2809, 1024, %s2807, %s2795, 512, 512, 32
        $region100: #{tpu_custom_call.1} parent=79 // pred_fallthru
          _
      $region80: #{tpu_custom_call.1} parent=5 // pred_fallthru
        _
      %p2815 = scmp.le.s32.totalorder 2, %s29
      // Predicated region
      $region101: #{tpu_custom_call.1} parent=5 // pred_check
        %p2816 = pneg %p2815
      $region102: #{tpu_custom_call.1} parent=5 // pred_check_branch
        %2818 = sbr.rel (%p2816) target = $region104
      $region103: #{tpu_custom_call.1} parent=5 // pred_region
        %s2819 = ssub.s32 %s29, 2
        // Predicated region
        $region105: #{tpu_custom_call.1} parent=103 // pred_check
          %p2820 = pneg %p383
        $region106: #{tpu_custom_call.1} parent=103 // pred_check_branch
          %2822 = sbr.rel (%p2820) target = $region108
        $region107: #{tpu_custom_call.1} parent=103 // pred_region
          %s2823 = sand.u32 %s368, 1
          %s2824 = scalar_lea.sflag [#allocation5], %s2823
          %s2825 = sand.u32 %s368, 1
          %s2826 = smul.addr %s2825, 64
          %s2827 = scalar_lea.vmem [#allocation11], %s2826
          %2828 = dma.done %s2824, 1024
        $region108: #{tpu_custom_call.1} parent=103 // pred_fallthru
          _
      $region104: #{tpu_custom_call.1} parent=5 // pred_fallthru
        _
    $region6: #{tpu_custom_call.1} parent=1 // loop_footer
      %s33 = sadd.s32 1, %s29
    $region7: #{tpu_custom_call.1} parent=1 // loop_footer_branch
      %28 = sbr.rel target = $region3
    $region8: #{tpu_custom_call.1} parent=1 // loop_exit
      _
    %2829 = vsyncpa [#allocation4], 1
    %s2830 = scalar_lea.sflag [#allocation4], 1
    %2831 = vsyncpa %s2830, 1
    %2832 = vsyncpa [#allocation7], 1
    %2833 = vsyncpa [#allocation10], 1
    %2834 = vsyncpa [#allocation5], 1
    %s2835 = scalar_lea.sflag [#allocation5], 1
    %2836 = vsyncpa %s2835, 1

</llo_original>
